<compile_context>
chip_gen: v7x
topology: tpu7x:2x2x1
jax: 0.10.0
libtpu: 0.0.40
codegen_flags: <defaults>
</compile_context>

<pallas_src>
import functools

import jax
import jax.numpy as jnp
from jax.experimental import pallas as pl
from jax.experimental.pallas import tpu as pltpu


def _round_up(x, m):
    return ((x + m - 1) // m) * m


def _vmem_limit_bytes():
    try:
        cap = getattr(pltpu.get_tpu_info(), "vmem_capacity_bytes", 64 << 20)
        return int(min(cap * 3 // 4, 96 << 20))
    except Exception:
        return 32 << 20


_VMEM_LIMIT = _vmem_limit_bytes()


# ----------------------------------------------------------------------------
# Generic fused GEMM:  out = relu?( x @ w + b )   (bf16 MXU, f32 accumulate)
# Used by the im2col fallback (7x7 stem, stride-2 3x3) and the 1x1 downsamples.
# ----------------------------------------------------------------------------
def _gemm_kernel(x_ref, w_ref, b_ref, o_ref, acc_ref, *, relu):
    @pl.when(pl.program_id(2) == 0)
    def _():
        acc_ref[...] = jnp.zeros_like(acc_ref)

    acc_ref[...] += jnp.dot(x_ref[...], w_ref[...],
                            preferred_element_type=jnp.float32)

    @pl.when(pl.program_id(2) == pl.num_programs(2) - 1)
    def _():
        out = acc_ref[...] + b_ref[...]
        if relu:
            out = jnp.maximum(out, 0.0)
        o_ref[...] = out.astype(o_ref.dtype)


def _pick_tk(kp, tm, tn, budget=12 << 20):
    """Largest 128-multiple divisor of Kp whose double-buffered tiles fit."""
    nk = kp // 128
    for chunks in range(1, nk + 1):
        if nk % chunks:
            continue
        tk = kp // chunks
        if 2 * 2 * (tm * tk + tk * tn) <= budget:   # bf16, double-buffered
            return tk, chunks
    return 128, nk


def fused_gemm(x, prep, relu, out_dtype=jnp.bfloat16):
    """x: [M, K]; prep: prepared (tap-major, padded, bf16) conv/linear weights."""
    M, K = x.shape
    w, b = prep["w"], prep["b"]
    Kp, Np = w.shape
    N = prep["oc"]
    assert K == prep["k"], (K, prep["k"])

    tn = 256 if Np % 256 == 0 else 128
    tm = min(512, _round_up(M, 16))
    Mp = _round_up(M, tm)
    tk, ksteps = _pick_tk(Kp, tm, tn)

    xb = x if x.dtype == jnp.bfloat16 else x.astype(jnp.bfloat16)
    if Mp != M or Kp != K:
        xb = jnp.pad(xb, ((0, Mp - M), (0, Kp - K)))

    if ksteps > 1:   # exposed K loop -> deepen the weight pipeline
        w_spec = pl.BlockSpec((tk, tn), lambda i, j, k: (k, j),
                              pipeline_mode=pl.Buffered(3))
    else:
        w_spec = pl.BlockSpec((tk, tn), lambda i, j, k: (k, j))

    out = pl.pallas_call(
        functools.partial(_gemm_kernel, relu=relu),
        out_shape=jax.ShapeDtypeStruct((Mp, Np), out_dtype),
        grid_spec=pltpu.PrefetchScalarGridSpec(
            num_scalar_prefetch=0,
            grid=(Mp // tm, Np // tn, ksteps),
            in_specs=[pl.BlockSpec((tm, tk), lambda i, j, k: (i, k)),
                      w_spec,
                      pl.BlockSpec((1, tn), lambda i, j, k: (0, j))],
            out_specs=pl.BlockSpec((tm, tn), lambda i, j, k: (i, j)),
            scratch_shapes=[pltpu.VMEM((tm, tn), jnp.float32)]),
        compiler_params=pltpu.CompilerParams(
            dimension_semantics=("parallel", "parallel", "arbitrary"),
            vmem_limit_bytes=_VMEM_LIMIT),
    )(xb, w, b)
    if Mp != M or Np != N:
        out = out[:M, :N]
    return out


# ----------------------------------------------------------------------------
# Stride-1 3x3 conv as 9 shifted GEMMs on the flattened padded image (no im2col)
# ----------------------------------------------------------------------------
def _conv3x3_s1_kernel(x_ref, w_ref, b_ref, o_ref, *, relu, wp, rows, cin):
    # x_ref: (1, Hp*Wp, C) bf16   flattened zero-padded image
    # w_ref: (Kp, tn)      bf16   tap-major rows: (kh*3+kw)*C + c
    # o_ref: (1, rows, tn) bf16   rows = OH*Wp (padded-width output rows)
    tn = o_ref.shape[2]
    acc = jnp.zeros((rows, tn), jnp.float32)
    for kh in range(3):
        for kw in range(3):
            d = kh * wp + kw                      # static row shift for this tap
            t = kh * 3 + kw
            xs = x_ref[0, d:d + rows, :]          # (rows, C)
            ws = w_ref[t * cin:(t + 1) * cin, :]  # (C, tn)
            acc += jnp.dot(xs, ws, preferred_element_type=jnp.float32)
    out = acc + b_ref[...]
    if relu:
        out = jnp.maximum(out, 0.0)
    o_ref[0] = out.astype(o_ref.dtype)


def conv3x3_s1(x, prep, relu):
    """3x3, stride 1, padding 1 conv+BN(+ReLU) in NHWC without im2col."""
    N, H, W, C = x.shape
    OC = prep["oc"]
    Kp, OCp = prep["w"].shape
    if x.dtype != jnp.bfloat16:
        x = x.astype(jnp.bfloat16)

    # pad: top 1, bottom 2 (one extra zero row so the last shifted read stays
    # in-bounds), left/right 1.  Flattened-row shift d = kh*Wp + kw then gives
    # exactly conv output at padded-width column positions.
    Wp = W + 2
    R = (H + 3) * Wp
    rows = H * Wp
    xf = jnp.pad(x, ((0, 0), (1, 2), (1, 1), (0, 0))).reshape(N, R, C)

    tn = 256 if OCp % 256 == 0 else 128
    out = pl.pallas_call(
        functools.partial(_conv3x3_s1_kernel, relu=relu, wp=Wp, rows=rows, cin=C),
        out_shape=jax.ShapeDtypeStruct((N, rows, OCp), jnp.bfloat16),
        grid_spec=pltpu.PrefetchScalarGridSpec(
            num_scalar_prefetch=0,
            grid=(N, OCp // tn),
            in_specs=[pl.BlockSpec((1, R, C), lambda n, j: (n, 0, 0)),
                      pl.BlockSpec((Kp, tn), lambda n, j: (0, j)),
                      pl.BlockSpec((1, tn), lambda n, j: (0, j))],
            out_specs=pl.BlockSpec((1, rows, tn), lambda n, j: (n, 0, j))),
        compiler_params=pltpu.CompilerParams(
            dimension_semantics=("parallel", "parallel"),
            vmem_limit_bytes=_VMEM_LIMIT),
    )(xf, prep["w"], prep["b"])
    # drop the 2 padded-width columns and OC padding (fuses with the next pad/add)
    return out.reshape(N, H, Wp, OCp)[:, :, :W, :OC]


# ----------------------------------------------------------------------------
# im2col fallback (tap-major features) -- only the 7x7 stem and stride-2 3x3s
# ----------------------------------------------------------------------------
def _im2col(x, KH, KW, stride, padding):
    # TODO(synk): still materializes patches in HBM; used only for 4 strided convs.
    if padding:
        x = jnp.pad(x, ((0, 0), (padding, padding), (padding, padding), (0, 0)))
    N, Hp, Wpp, C = x.shape
    OH = (Hp - KH) // stride + 1
    OW = (Wpp - KW) // stride + 1
    taps = []
    for kh in range(KH):
        for kw in range(KW):
            taps.append(jax.lax.slice(
                x, (0, kh, kw, 0),
                (N, kh + (OH - 1) * stride + 1, kw + (OW - 1) * stride + 1, C),
                (1, stride, stride, 1)))
    return jnp.concatenate(taps, axis=-1), OH, OW   # feature index = (kh*KW+kw)*C + c


def conv_bn(x, prep, stride, padding, relu):
    """Conv2d + folded BatchNorm (+ReLU) in NHWC, bf16 activations."""
    KH, KW = prep["kh"], prep["kw"]
    N = x.shape[0]
    if KH == 3 and KW == 3 and stride == 1 and padding == 1:
        return conv3x3_s1(x, prep, relu)
    if KH == 1 and KW == 1 and padding == 0:
        xs = x[:, ::stride, ::stride, :]
        _, OH, OW, C = xs.shape
        out = fused_gemm(xs.reshape(N * OH * OW, C), prep, relu)
        return out.reshape(N, OH, OW, prep["oc"])
    pm, OH, OW = _im2col(x, KH, KW, stride, padding)
    out = fused_gemm(pm.reshape(N * OH * OW, pm.shape[-1]), prep, relu)
    return out.reshape(N, OH, OW, prep["oc"])


def max_pool_3x3_s2_p1(x):
    # TODO(synk): maxpool kept in plain JAX (window-reduction glue, not hot path).
    return jax.lax.reduce_window(
        x, jnp.array(-jnp.inf, x.dtype), jax.lax.max,
        window_dimensions=(1, 3, 3, 1), window_strides=(1, 2, 2, 1),
        padding=((0, 0), (1, 1), (1, 1), (0, 0)))


# ----------------------------------------------------------------------------
# Fused fc head: out = relu( relu(x@W1+b1) @ W2 + b2 )   -- single tiny launch
# ----------------------------------------------------------------------------
def _head_kernel(x_ref, w1_ref, b1_ref, w2_ref, b2_ref, o_ref):
    h = jnp.dot(x_ref[...], w1_ref[...], preferred_element_type=jnp.float32)
    h = jnp.maximum(h + b1_ref[...], 0.0)
    o = jnp.dot(h.astype(jnp.bfloat16), w2_ref[...],
                preferred_element_type=jnp.float32)
    o_ref[...] = jnp.maximum(o + b2_ref[...], 0.0)


def fc_head(x, head):
    M, K = x.shape
    w1, b1, w2, b2 = head["w1"], head["b1"], head["w2"], head["b2"]
    K1p, H1p = w1.shape
    N2p = w2.shape[1]
    Mp = _round_up(max(M, 8), 8)
    xb = x.astype(jnp.bfloat16)
    if Mp != M or K1p != K:
        xb = jnp.pad(xb, ((0, Mp - M), (0, K1p - K)))
    out = pl.pallas_call(
        _head_kernel,
        out_shape=jax.ShapeDtypeStruct((Mp, N2p), jnp.float32),
        grid_spec=pltpu.PrefetchScalarGridSpec(
            num_scalar_prefetch=0, grid=(1,),
            in_specs=[pl.BlockSpec((Mp, K1p), lambda i: (0, 0)),
                      pl.BlockSpec((K1p, H1p), lambda i: (0, 0)),
                      pl.BlockSpec((1, H1p), lambda i: (0, 0)),
                      pl.BlockSpec((H1p, N2p), lambda i: (0, 0)),
                      pl.BlockSpec((1, N2p), lambda i: (0, 0))],
            out_specs=pl.BlockSpec((Mp, N2p), lambda i: (0, 0))),
        compiler_params=pltpu.CompilerParams(vmem_limit_bytes=_VMEM_LIMIT),
    )(xb, w1, b1, w2, b2)
    return out[:M, :head["n2"]]


# ----------------------------------------------------------------------------
# One-time parameter preparation: BN fold, tap-major layout, pad to 128, bf16
# ----------------------------------------------------------------------------
def _fold_bn(p, eps=1e-5):
    scale = p["gamma"] / jnp.sqrt(p["var"] + eps)
    w_eff = p["w"] * scale[:, None, None, None]          # (OC, C, KH, KW)
    b_eff = p["beta"] - p["mean"] * scale
    return w_eff, b_eff


def _prepare_conv(p):
    w_eff, b_eff = _fold_bn(p)
    OC, C, KH, KW = p["w"].shape
    # tap-major 2D layout: row (kh*KW + kw)*C + c  -> matches both conv paths
    w2d = jnp.transpose(w_eff, (2, 3, 1, 0)).reshape(KH * KW * C, OC)
    K = KH * KW * C
    Kp = _round_up(K, 128)                # only to the lane multiple (no tk round-up)
    OCp = _round_up(OC, 128)
    w_p = jnp.pad(w2d.astype(jnp.bfloat16), ((0, Kp - K), (0, OCp - OC)))
    b_p = jnp.pad(b_eff.astype(jnp.float32), (0, OCp - OC)).reshape(1, OCp)
    return dict(w=w_p, b=b_p, oc=OC, k=K, kh=KH, kw=KW, cin=C)


def _prep_head(fc1_w, fc1_b, fc2_w, fc2_b):
    K1, N1 = fc1_w.shape
    K2, N2 = fc2_w.shape
    K1p, N1p, N2p = _round_up(K1, 128), _round_up(N1, 128), _round_up(N2, 128)
    w1 = jnp.pad(fc1_w.astype(jnp.bfloat16), ((0, K1p - K1), (0, N1p - N1)))
    b1 = jnp.pad(fc1_b.astype(jnp.float32), (0, N1p - N1)).reshape(1, N1p)
    w2 = jnp.pad(fc2_w.astype(jnp.bfloat16), ((0, N1p - K2), (0, N2p - N2)))
    b2 = jnp.pad(fc2_b.astype(jnp.float32), (0, N2p - N2)).reshape(1, N2p)
    return dict(w1=w1, b1=b1, w2=w2, b2=b2, n2=N2)


def prepare_params(params):
    prep = {"conv1": _prepare_conv(params["conv1"])}
    layers = []
    for blocks in params["layers"]:
        pblocks = []
        for blk in blocks:
            pb = {"conv1": _prepare_conv(blk["conv1"]),
                  "conv2": _prepare_conv(blk["conv2"])}
            if "down" in blk:
                pb["down"] = _prepare_conv(blk["down"])
            pblocks.append(pb)
        layers.append(pblocks)
    prep["layers"] = layers
    prep["head"] = _prep_head(params["fc1_w"], params["fc1_b"],
                              params["fc2_w"], params["fc2_b"])
    return prep


# ----------------------------------------------------------------------------
# Deterministic parameter init (shapes from resnet18 / the module __init__)
# ----------------------------------------------------------------------------
def _conv_bn_params(key, cin, cout, k):
    fan_in = cin * k * k
    w = jax.random.normal(key, (cout, cin, k, k), jnp.float32) * jnp.sqrt(2.0 / fan_in)
    return dict(w=w,
                gamma=jnp.ones((cout,), jnp.float32),
                beta=jnp.zeros((cout,), jnp.float32),
                mean=jnp.zeros((cout,), jnp.float32),
                var=jnp.ones((cout,), jnp.float32))


def init_params(key):
    keys = iter(jax.random.split(key, 64))
    params = {"conv1": _conv_bn_params(next(keys), 3, 64, 7)}
    layers = []
    cin = 64
    for cout, stride in [(64, 1), (128, 2), (256, 2), (512, 2)]:
        blocks = []
        for b in range(2):
            s = stride if b == 0 else 1
            blk = {"conv1": _conv_bn_params(next(keys), cin, cout, 3),
                   "conv2": _conv_bn_params(next(keys), cout, cout, 3)}
            if s != 1 or cin != cout:
                blk["down"] = _conv_bn_params(next(keys), cin, cout, 1)
            blocks.append(blk)
            cin = cout
        layers.append(blocks)
    params["layers"] = layers
    params["fc1_w"] = jax.random.normal(next(keys), (512, 200), jnp.float32) / jnp.sqrt(512.0)
    params["fc1_b"] = jax.random.normal(next(keys), (200,), jnp.float32) * 0.01
    params["fc2_w"] = jax.random.normal(next(keys), (200, 64), jnp.float32) / jnp.sqrt(200.0)
    params["fc2_b"] = jax.random.normal(next(keys), (64,), jnp.float32) * 0.01
    return params


# ----------------------------------------------------------------------------
# Forward pass (matches StartingNetwork.forward: resnet -> flatten -> fc1+relu -> fc2+relu)
# ----------------------------------------------------------------------------
def basic_block(x, blk, stride):
    if "down" in blk:
        identity = conv_bn(x, blk["down"], stride=stride, padding=0, relu=False)
    else:
        identity = x
    out = conv_bn(x, blk["conv1"], stride=stride, padding=1, relu=True)
    out = conv_bn(out, blk["conv2"], stride=1, padding=1, relu=False)
    # residual add + ReLU: one XLA elementwise fusion (no extra pad copies)
    return jnp.maximum(out + identity, 0.0)


def starting_network_forward(prepared, x_nchw):
    # single layout conversion at the model boundary: NCHW -> NHWC, bf16 activations
    x = jnp.transpose(x_nchw, (0, 2, 3, 1)).astype(jnp.bfloat16)
    x = conv_bn(x, prepared["conv1"], stride=2, padding=3, relu=True)
    x = max_pool_3x3_s2_p1(x)
    strides = [1, 2, 2, 2]
    for li, blocks in enumerate(prepared["layers"]):
        for bi, blk in enumerate(blocks):
            s = strides[li] if bi == 0 else 1
            x = basic_block(x, blk, s)
    # adaptive avg-pool to 1x1 + flatten -> (N, 512)
    x = jnp.mean(x.astype(jnp.float32), axis=(1, 2))
    # note: self.sigmoid is defined in __init__ but never applied in forward()
    return fc_head(x, prepared["head"])


# ----------------------------------------------------------------------------
# One-off numerical check of a conv path vs. lax.conv (same folded bf16 weights)
# ----------------------------------------------------------------------------
def _check_conv(x_nhwc, raw, prep, stride, padding, relu):
    w_eff, b_eff = _fold_bn(raw)
    w_hwio = jnp.transpose(w_eff, (2, 3, 1, 0)).astype(jnp.bfloat16)
    ref = jax.lax.conv_general_dilated(
        x_nhwc.astype(jnp.bfloat16), w_hwio, (stride, stride),
        [(padding, padding), (padding, padding)],
        dimension_numbers=("NHWC", "HWIO", "NHWC"),
        preferred_element_type=jnp.float32) + b_eff
    if relu:
        ref = jnp.maximum(ref, 0.0)
    got = conv_bn(x_nhwc, prep, stride=stride, padding=padding, relu=relu)
    err = float(jnp.max(jnp.abs(got.astype(jnp.float32) - ref)))
    tol = 0.05 + 0.02 * float(jnp.max(jnp.abs(ref)))
    assert err <= tol, f"conv path mismatch: err={err} tol={tol}"


if __name__ == "__main__":
    key = jax.random.PRNGKey(0)
    pkey, xkey, ckey = jax.random.split(key, 3)
    params = init_params(pkey)
    prepared = prepare_params(params)          # one-time BN fold / layout / pad / bf16

    # resnet18 conv1 requires 3 input channels (docstring says 1-channel, but the
    # code path needs 3); spatial 64 keeps the 32x downsampling valid at small size.
    x = jax.random.normal(xkey, (2, 3, 64, 64), jnp.float32)

    # one-off correctness checks of each conv path (tap ordering / shifted GEMM)
    x_nhwc = jnp.transpose(x, (0, 2, 3, 1)).astype(jnp.bfloat16)
    _check_conv(x_nhwc, params["conv1"], prepared["conv1"],
                stride=2, padding=3, relu=True)                       # 7x7 im2col path
    k1, k2 = jax.random.split(ckey)
    x1 = jax.random.normal(k1, (2, 16, 16, 64), jnp.bfloat16)
    _check_conv(x1, params["layers"][0][0]["conv1"], prepared["layers"][0][0]["conv1"],
                stride=1, padding=1, relu=True)                       # shifted 3x3 s1 path
    x2 = jax.random.normal(k2, (2, 16, 16, 64), jnp.bfloat16)
    _check_conv(x2, params["layers"][1][0]["conv1"], prepared["layers"][1][0]["conv1"],
                stride=2, padding=1, relu=True)                       # 3x3 s2 im2col path

    fwd = jax.jit(functools.partial(starting_network_forward, prepared))
    out = jax.block_until_ready(fwd(x))
    assert out.shape == (2, 64), out.shape
    assert bool(jnp.all(out >= 0.0))           # final ReLU
    print("KERNEL_OK")
</pallas_src>

<mosaic_0001>
module attributes {stable_mosaic.version = 11 : i64} {
  func.func @_gemm_kernel(%arg0: i32, %arg1: i32, %arg2: i32, %arg3: memref<512x256xbf16, #tpu.memory_space<vmem>>, %arg4: memref<256x128xbf16, #tpu.memory_space<vmem>>, %arg5: memref<1x128xf32, #tpu.memory_space<vmem>>, %arg6: memref<512x128xbf16, #tpu.memory_space<vmem>>, %arg7: memref<512x128xf32, #tpu.memory_space<vmem>>) attributes {dimension_semantics = [#tpu.dimension_semantics<parallel>, #tpu.dimension_semantics<parallel>, #tpu.dimension_semantics<arbitrary>], iteration_bounds = array<i64: 4, 1, 1>, scalar_prefetch = 0 : i64, scratch_operands = 1 : i64, tpu.core_type = #tpu.core_type<tc>, window_params = [{transform_indices = @transform_0, window_bounds = array<i64: 512, 256>}, {transform_indices = @transform_1, window_bounds = array<i64: 256, 128>}, {transform_indices = @transform_2, window_bounds = array<i64: 1, 128>}, {transform_indices = @transform_3, window_bounds = array<i64: 512, 128>}]} {
    %c0_i32 = arith.constant 0 : i32
    %0 = arith.cmpi eq, %arg2, %c0_i32 : i32
    %1 = arith.extui %0 : i1 to i32
    %c0_i32_0 = arith.constant 0 : i32
    %2 = arith.cmpi ne, %1, %c0_i32_0 : i32
    scf.if %2 {
      %cst_10 = arith.constant 0.000000e+00 : f32
      %12 = vector.broadcast %cst_10 : f32 to vector<512x128xf32>
      %c0_11 = arith.constant 0 : index
      %c0_12 = arith.constant 0 : index
      %13 = vector.load %arg7[%c0_11, %c0_12] : memref<512x128xf32, #tpu.memory_space<vmem>>, vector<512x128xf32>
      tpu.vector_store %arg7[%c0_11, %c0_12], %12 {strides = array<i32>} : memref<512x128xf32, #tpu.memory_space<vmem>>, vector<512x128xf32>,
    } else {
    }
    %c0 = arith.constant 0 : index
    %c0_1 = arith.constant 0 : index
    %3 = vector.load %arg7[%c0, %c0_1] : memref<512x128xf32, #tpu.memory_space<vmem>>, vector<512x128xf32>
    %c0_2 = arith.constant 0 : index
    %c0_3 = arith.constant 0 : index
    %4 = vector.load %arg3[%c0_2, %c0_3] : memref<512x256xbf16, #tpu.memory_space<vmem>>, vector<512x256xbf16>
    %c0_4 = arith.constant 0 : index
    %c0_5 = arith.constant 0 : index
    %5 = vector.load %arg4[%c0_4, %c0_5] : memref<256x128xbf16, #tpu.memory_space<vmem>>, vector<256x128xbf16>
    %cst = arith.constant dense<0.000000e+00> : vector<512x128xf32>
    %6 = tpu.matmul %4, %5, %cst {dimension_numbers = #tpu.dot_dimension_numbers<[1], [0], [0], [1], [0, 0, 1, 1], [], []>} : vector<512x256xbf16>, vector<256x128xbf16>, vector<512x128xf32> -> vector<512x128xf32>
    %7 = arith.addf %3, %6 : vector<512x128xf32>
    %c0_6 = arith.constant 0 : index
    %c0_7 = arith.constant 0 : index
    %8 = vector.load %arg7[%c0_6, %c0_7] : memref<512x128xf32, #tpu.memory_space<vmem>>, vector<512x128xf32>
    tpu.vector_store %arg7[%c0_6, %c0_7], %7 {strides = array<i32>} : memref<512x128xf32, #tpu.memory_space<vmem>>, vector<512x128xf32>,
    %c0_i32_8 = arith.constant 0 : i32
    %9 = arith.cmpi eq, %arg2, %c0_i32_8 : i32
    %10 = arith.extui %9 : i1 to i32
    %c0_i32_9 = arith.constant 0 : i32
    %11 = arith.cmpi ne, %10, %c0_i32_9 : i32
    scf.if %11 {
      %c0_10 = arith.constant 0 : index
      %c0_11 = arith.constant 0 : index
      %12 = vector.load %arg7[%c0_10, %c0_11] : memref<512x128xf32, #tpu.memory_space<vmem>>, vector<512x128xf32>
      %c0_12 = arith.constant 0 : index
      %c0_13 = arith.constant 0 : index
      %13 = vector.load %arg5[%c0_12, %c0_13] : memref<1x128xf32, #tpu.memory_space<vmem>>, vector<1x128xf32>
      %14 = vector.broadcast %13 : vector<1x128xf32> to vector<512x128xf32>
      %15 = arith.addf %12, %14 : vector<512x128xf32>
      %cst_14 = arith.constant 0.000000e+00 : f32
      %16 = vector.broadcast %cst_14 : f32 to vector<512x128xf32>
      %17 = arith.maximumf %15, %16 : vector<512x128xf32>
      %18 = arith.truncf %17 : vector<512x128xf32> to vector<512x128xbf16>
      %c0_15 = arith.constant 0 : index
      %c0_16 = arith.constant 0 : index
      %19 = vector.load %arg6[%c0_15, %c0_16] : memref<512x128xbf16, #tpu.memory_space<vmem>>, vector<512x128xbf16>
      tpu.vector_store %arg6[%c0_15, %c0_16], %18 {strides = array<i32>} : memref<512x128xbf16, #tpu.memory_space<vmem>>, vector<512x128xbf16>,
    } else {
    }
    return
  }
  func.func @transform_0(%arg0: i32, %arg1: i32, %arg2: i32) -> (i32, i32) {
    %c0_i32 = arith.constant 0 : i32
    return %arg0, %arg2 : i32, i32
  }
  func.func @transform_1(%arg0: i32, %arg1: i32, %arg2: i32) -> (i32, i32) {
    %c0_i32 = arith.constant 0 : i32
    return %arg2, %arg1 : i32, i32
  }
  func.func @transform_2(%arg0: i32, %arg1: i32, %arg2: i32) -> (i32, i32) {
    %c0_i32 = arith.constant 0 : i32
    %c0_i32_0 = arith.constant 0 : i32
    return %c0_i32, %arg1 : i32, i32
  }
  func.func @transform_3(%arg0: i32, %arg1: i32, %arg2: i32) -> (i32, i32) {
    %c0_i32 = arith.constant 0 : i32
    return %arg0, %arg1 : i32, i32
  }
}

</mosaic_0001>

<llo_original>
// kernel: tpu_custom_call.1
$region0: #{tpu_custom_call.1}
  #allocation0 [shape = 'u32[]', space=smem, size = 0x4, offset = 0x4, fixed_abs, tag = 'smem constant byte address 0x4 - core index']
  #allocation1 [shape = 'u32[144,128]{1,0:T(1,128)}', space=vmem, size = 0x12000, scoped, tag = 'internal scratch']
  #allocation2 [shape = 'f32[512,128]{1,0:T(8,128)}', space=vmem, size = 0x40000, scoped, tag = 'scratch operand']
  %s0 = inlined_call_operand.hbm [shape: bf16[2048,256], index: 0, kind: input, shape index: {}]
  %s1 = inlined_call_operand.hbm [shape: bf16[256,128], index: 1, kind: input, shape index: {}]
  %s2 = inlined_call_operand.vmem [shape: f32[1,128], index: 2, kind: input, shape index: {}]
  %s3 = inlined_call_operand.hbm [shape: bf16[2048,128], index: 3, kind: output, shape index: {}]
  %s4 = sld [smem:[#allocation0]]
  $region61: #{tpu_custom_call.1} parent=0
    _
  %s6 = ssub.s32 1, %s4
  %s7 = scalar_select 0, %s6, %s4
  $region1: #{tpu_custom_call.1} parent=0
    #allocation3 [shape = 'u8[524288]{0}', space=vmem, size = 0x80000, scoped, tag = 'input window, operand 0']
    #allocation4 [shape = 's32[2]{0}', space=sflag, size = 0x8, scoped, tag = 'scoped memory for tpu_custom_call.1']
    #allocation5 [shape = 's32[2]{0}', space=sflag, size = 0x8, scoped, tag = 'scoped memory for tpu_custom_call.1']
    #allocation6 [shape = 'u8[65536]{0}', space=vmem, size = 0x10000, scoped, tag = 'input window, operand 1, single buffered']
    #allocation7 [shape = 's32[1]{0}', space=sflag, size = 0x4, scoped, tag = 'scoped memory for tpu_custom_call.1']
    #allocation8 [shape = 'u8[262144]{0}', space=vmem, size = 0x40000, scoped, tag = 'output window, operand 0']
    %8 = vsyncpa [#allocation4], 0
    %s9 = scalar_lea.sflag [#allocation4], 1
    %10 = vsyncpa %s9, 0
    %11 = vsyncpa [#allocation7], 0
    %12 = vsyncpa [#allocation5], 0
    %s13 = scalar_lea.sflag [#allocation5], 1
    %14 = vsyncpa %s13, 0
    loop: start=0, step=1, limit=6
    $region2: #{tpu_custom_call.1} parent=1 // loop_pre_header
      _
    $region3: #{tpu_custom_call.1} parent=1 // loop_header
      %s16 = sphi 0, %s20
      %p17 = scmp.ge.s32.totalorder %s16, 6
      %s23 = sphi 0, %s42
      %s24 = sphi 0, %s38
      %s25 = sphi 0, %s34
      %s26 = sphi 0, %s23
      %s27 = sphi 0, %s24
      %s28 = sphi 0, %s25
      %s29 = sphi 0, %s26
      %s30 = sphi 0, %s27
      %s31 = sphi 0, %s28
      %s47 = sphi 0, %s49
      %s50 = sphi 0, %s47
      %s51 = sphi 0, %s50
      %s67 = sphi 0, %s51
      %s75 = sphi 0, %s77
      %s78 = sphi 0, %s75
      %s79 = sphi 0, %s78
      %s95 = sphi 0, %s79
      %s101 = sphi 0, %s103
      %s104 = sphi 0, %s101
      %s105 = sphi 0, %s104
      %s121 = sphi 0, %s105
      %s129 = sphi 0, %s131
      %s132 = sphi 0, %s129
      %s133 = sphi 0, %s132
      %s149 = sphi 0, %s133
    $region4: #{tpu_custom_call.1} parent=1 // loop_header_branch
      %19 = sbr.rel (%p17) target = $region8
    $region5: #{tpu_custom_call.1} parent=1 // loop_body
      %s21 = ssub.s32 %s16, 1
      %s22 = ssub.s32 %s16, 2
      %s32 = sadd.s32 1, %s25
      %p33 = scmp.ge.s32.totalorder %s32, 1
      %s34 = scalar_select %p33, 0, %s32
      %s35 = sadd.s32 1, %s24
      %s36 = scalar_select %p33, %s35, %s24
      %p37 = scmp.ge.s32.totalorder %s36, 1
      %s38 = scalar_select %p37, 0, %s36
      %s39 = sadd.s32 1, %s23
      %s40 = scalar_select %p37, %s39, %s23
      %p41 = scmp.ge.s32.totalorder %s40, 4
      %s42 = scalar_select %p41, 0, %s40
      %s43 = ssub.s32 %s23, %s42
      %s44 = ssub.s32 %s25, %s34
      %s45 = sor.u32 %s43, %s44
      %p46 = scmp.eq.s32.totalorder %s45, 0
      %s48 = sadd.s32 %s47, 1
      %s49 = scalar_select %p46, %s47, %s48
      %p52 = pneg %p46
      %p53 = scmp.eq.s32.totalorder %s16, 3
      %p54 = por %p52, %p53
      %p55 = scmp.ne.s32.totalorder %s47, %s50
      %p56 = scmp.eq.s32.totalorder %s16, 0
      %p57 = por %p55, %p56
      %p58 = scmp.ne.s32.totalorder %s47, %s50
      %p59 = scmp.eq.s32.totalorder %s21, 3
      %p60 = por %p58, %p59
      %p61 = scmp.ne.s32.totalorder %s50, %s51
      %p62 = scmp.eq.s32.totalorder %s21, 0
      %p63 = por %p61, %p62
      %p64 = scmp.ne.s32.totalorder %s50, %s51
      %p65 = scmp.eq.s32.totalorder %s22, 3
      %p66 = por %p64, %p65
      %p68 = scmp.ne.s32.totalorder %s51, %s67
      %p69 = scmp.eq.s32.totalorder %s22, 0
      %p70 = por %p68, %p69
      %s71 = ssub.s32 %s25, %s34
      %s72 = ssub.s32 %s24, %s38
      %s73 = sor.u32 %s71, %s72
      %p74 = scmp.eq.s32.totalorder %s73, 0
      %s76 = sadd.s32 %s75, 1
      %s77 = scalar_select %p74, %s75, %s76
      %p80 = pneg %p74
      %p81 = scmp.eq.s32.totalorder %s16, 3
      %p82 = por %p80, %p81
      %p83 = scmp.ne.s32.totalorder %s75, %s78
      %p84 = scmp.eq.s32.totalorder %s16, 0
      %p85 = por %p83, %p84
      %p86 = scmp.ne.s32.totalorder %s75, %s78
      %p87 = scmp.eq.s32.totalorder %s21, 3
      %p88 = por %p86, %p87
      %p89 = scmp.ne.s32.totalorder %s78, %s79
      %p90 = scmp.eq.s32.totalorder %s21, 0
      %p91 = por %p89, %p90
      %p92 = scmp.ne.s32.totalorder %s78, %s79
      %p93 = scmp.eq.s32.totalorder %s22, 3
      %p94 = por %p92, %p93
      %p96 = scmp.ne.s32.totalorder %s79, %s95
      %p97 = scmp.eq.s32.totalorder %s22, 0
      %p98 = por %p96, %p97
      %s99 = ssub.s32 %s24, %s38
      %p100 = scmp.eq.s32.totalorder %s99, 0
      %s102 = sadd.s32 %s101, 1
      %s103 = scalar_select %p100, %s101, %s102
      %p106 = pneg %p100
      %p107 = scmp.eq.s32.totalorder %s16, 3
      %p108 = por %p106, %p107
      %p109 = scmp.ne.s32.totalorder %s101, %s104
      %p110 = scmp.eq.s32.totalorder %s16, 0
      %p111 = por %p109, %p110
      %p112 = scmp.ne.s32.totalorder %s101, %s104
      %p113 = scmp.eq.s32.totalorder %s21, 3
      %p114 = por %p112, %p113
      %p115 = scmp.ne.s32.totalorder %s104, %s105
      %p116 = scmp.eq.s32.totalorder %s21, 0
      %p117 = por %p115, %p116
      %p118 = scmp.ne.s32.totalorder %s104, %s105
      %p119 = scmp.eq.s32.totalorder %s22, 3
      %p120 = por %p118, %p119
      %p122 = scmp.ne.s32.totalorder %s105, %s121
      %p123 = scmp.eq.s32.totalorder %s22, 0
      %p124 = por %p122, %p123
      %s125 = ssub.s32 %s23, %s42
      %s126 = ssub.s32 %s24, %s38
      %s127 = sor.u32 %s125, %s126
      %p128 = scmp.eq.s32.totalorder %s127, 0
      %s130 = sadd.s32 %s129, 1
      %s131 = scalar_select %p128, %s129, %s130
      %p134 = pneg %p128
      %p135 = scmp.eq.s32.totalorder %s16, 3
      %p136 = por %p134, %p135
      %p137 = scmp.ne.s32.totalorder %s129, %s132
      %p138 = scmp.eq.s32.totalorder %s16, 0
      %p139 = por %p137, %p138
      %p140 = scmp.ne.s32.totalorder %s129, %s132
      %p141 = scmp.eq.s32.totalorder %s21, 3
      %p142 = por %p140, %p141
      %p143 = scmp.ne.s32.totalorder %s132, %s133
      %p144 = scmp.eq.s32.totalorder %s21, 0
      %p145 = por %p143, %p144
      %p146 = scmp.ne.s32.totalorder %s132, %s133
      %p147 = scmp.eq.s32.totalorder %s22, 3
      %p148 = por %p146, %p147
      %p150 = scmp.ne.s32.totalorder %s133, %s149
      %p151 = scmp.eq.s32.totalorder %s22, 0
      %p152 = por %p150, %p151
      %p153 = scmp.le.s32.totalorder 1, %s16
      %p154 = scmp.lt.s32.totalorder %s16, 5
      %p155 = pnand %p153, %p154
      %p156 = pneg %p155
      // Predicated region
      $region9: #{tpu_custom_call.1} parent=5 // pred_check
        _
      $region10: #{tpu_custom_call.1} parent=5 // pred_check_branch
        %158 = sbr.rel (%p155) target = $region12
      $region11: #{tpu_custom_call.1} parent=5 // pred_region
        %s159 = ssub.s32 %s16, 1
        // Predicated region
        $region13: #{tpu_custom_call.1} parent=11 // pred_check
          %p160 = pneg %p91
        $region14: #{tpu_custom_call.1} parent=11 // pred_check_branch
          %162 = sbr.rel (%p160) target = $region16
        $region15: #{tpu_custom_call.1} parent=11 // pred_region
          %s163 = smul.u32 32, %s28
          %s165 = ssub.s32 2048, 2048
          %166 = vsyncadd [#allocation7], %s165
          %s167 = sadd.s32 %s27, %s163
          %s168 = smul.addr %s167, 64
          %s169 = scalar_lea.hbm %s1, %s168
          %s170 = sshll.u32 [#allocation6], 4
          %s171 = int_to_ptr.vmem [resolvable:$true] %s170
          %176 = dma.hbm_to_vmem [thread:$0]  %s169, 2048, %s171, [#allocation7], 64, 64, 4
        $region16: #{tpu_custom_call.1} parent=11 // pred_fallthru
          _
        // Predicated region
        $region17: #{tpu_custom_call.1} parent=11 // pred_check
          %p177 = pneg %p117
        $region18: #{tpu_custom_call.1} parent=11 // pred_check_branch
          %179 = sbr.rel (%p177) target = $region20
        $region19: #{tpu_custom_call.1} parent=11 // pred_region
          %p180 = scmp.lt.s32.totalorder %s27, 0
          %s181 = scalar_select %p180, %s27, 0
          %s182 = scalar_lea.vmem %s2, %s181
        $region20: #{tpu_custom_call.1} parent=11 // pred_fallthru
          _
      $region12: #{tpu_custom_call.1} parent=5 // pred_fallthru
        _
      %p183 = scmp.lt.s32.totalorder %s16, 4
      // Predicated region
      $region21: #{tpu_custom_call.1} parent=5 // pred_check
        %p184 = pneg %p183
      $region22: #{tpu_custom_call.1} parent=5 // pred_check_branch
        %186 = sbr.rel (%p184) target = $region24
      $region23: #{tpu_custom_call.1} parent=5 // pred_region
        // Predicated region
        $region25: #{tpu_custom_call.1} parent=23 // pred_check
          %p187 = pneg %p57
        $region26: #{tpu_custom_call.1} parent=23 // pred_check_branch
          %189 = sbr.rel (%p187) target = $region28
        $region27: #{tpu_custom_call.1} parent=23 // pred_region
          %s190 = sand.u32 %s47, 1
          %s191 = scalar_lea.sflag [#allocation4], %s190
          %s192 = sand.u32 %s47, 1
          %s193 = smul.addr %s192, 512
          %s194 = scalar_lea.vmem [#allocation3], %s193
          %s195 = smul.u32 64, %s23
          %s196 = smul.u32 2, %s25
          %s198 = ssub.s32 8192, 8192
          %199 = vsyncadd %s191, %s198
          %s200 = smul.addr %s195, 2
          %s201 = sadd.s32 %s196, %s200
          %s202 = smul.addr %s201, 64
          %s203 = scalar_lea.hbm %s0, %s202
          %s204 = sshll.u32 %s194, 4
          %s205 = int_to_ptr.vmem [resolvable:$true] %s204
          %210 = dma.hbm_to_vmem [thread:$0]  %s203, 8192, %s205, %s191, 128, 128, 8
        $region28: #{tpu_custom_call.1} parent=23 // pred_fallthru
          _
      $region24: #{tpu_custom_call.1} parent=5 // pred_fallthru
        _
      %p211 = scmp.le.s32.totalorder 1, %s16
      %p212 = scmp.lt.s32.totalorder %s16, 5
      %p213 = pnand %p211, %p212
      %p214 = pneg %p213
      // Predicated region
      $region29: #{tpu_custom_call.1} parent=5 // pred_check
        _
      $region30: #{tpu_custom_call.1} parent=5 // pred_check_branch
        %216 = sbr.rel (%p213) target = $region32
      $region31: #{tpu_custom_call.1} parent=5 // pred_region
        %s217 = ssub.s32 %s16, 1
        %s218 = sand.u32 %s50, 1
        %s219 = scalar_lea.sflag [#allocation4], %s218
        %s220 = sand.u32 %s50, 1
        %s221 = smul.addr %s220, 512
        %s222 = scalar_lea.vmem [#allocation3], %s221
        // Predicated region
        $region33: #{tpu_custom_call.1} parent=31 // pred_check
          %p223 = pneg %p63
        $region34: #{tpu_custom_call.1} parent=31 // pred_check_branch
          %225 = sbr.rel (%p223) target = $region36
        $region35: #{tpu_custom_call.1} parent=31 // pred_region
          %226 = dma.done %s219, 8192
        $region36: #{tpu_custom_call.1} parent=31 // pred_fallthru
          _
        // Predicated region
        $region37: #{tpu_custom_call.1} parent=31 // pred_check
          %p227 = pneg %p91
        $region38: #{tpu_custom_call.1} parent=31 // pred_check_branch
          %229 = sbr.rel (%p227) target = $region40
        $region39: #{tpu_custom_call.1} parent=31 // pred_region
          %230 = dma.done [#allocation7], 2048
        $region40: #{tpu_custom_call.1} parent=31 // pred_fallthru
          _
        %s231 = sand.u32 %s50, 1
        %s232 = scalar_lea.sflag [#allocation4], %s231
        %s233 = sand.u32 %s50, 1
        %s234 = smul.addr %s233, 512
        %s235 = scalar_lea.vmem [#allocation3], %s234
        %p236 = pneg %p63
        %p237 = pneg %p60
        %p238 = pneg %p91
        %p239 = pneg %p88
        %p240 = scmp.lt.s32.totalorder %s27, 0
        %s241 = scalar_select %p240, %s27, 0
        %s242 = scalar_lea.vmem %s2, %s241
        %p243 = pneg %p117
        %p244 = pneg %p114
        %p245 = pneg %p145
        %p246 = pneg %p142
        %s247 = sand.u32 %s132, 1
        %s248 = scalar_lea.sflag [#allocation5], %s247
        %s249 = sand.u32 %s132, 1
        %s250 = smul.addr %s249, 256
        %s251 = scalar_lea.vmem [#allocation8], %s250
        %s252 = smul.u32 64, %s26
        %s253 = smul.u32 2, %s28
        %s254 = smul.u32 32, %s28
        %p255 = scmp.lt.s32.totalorder %s27, 0
        %s256 = scalar_select %p255, %s27, 0
        %s257 = scalar_lea.vmem %s2, %s256
        %s258 = smul.u32 64, %s26
        %p260 = scmp.eq.s32.totalorder %s28, 0
        // Predicated region
        $region41: #{tpu_custom_call.1} parent=31 // pred_check
          %p261 = pneg %p260
        $region42: #{tpu_custom_call.1} parent=31 // pred_check_branch
          %263 = sbr.rel (%p261) target = $region44
        $region43: #{tpu_custom_call.1} parent=31 // pred_region
          %264 = vst [vmem:[#allocation2] sm:$0xff] 0.0
          %265 = vst [vmem:[#allocation2 + $0x8] sm:$0xff] 0.0
          %266 = vst [vmem:[#allocation2 + $0x10] sm:$0xff] 0.0
          %267 = vst [vmem:[#allocation2 + $0x18] sm:$0xff] 0.0
          %268 = vst [vmem:[#allocation2 + $0x20] sm:$0xff] 0.0
          %269 = vst [vmem:[#allocation2 + $0x28] sm:$0xff] 0.0
          %270 = vst [vmem:[#allocation2 + $0x30] sm:$0xff] 0.0
          %271 = vst [vmem:[#allocation2 + $0x38] sm:$0xff] 0.0
          %272 = vst [vmem:[#allocation2 + $0x40] sm:$0xff] 0.0
          %273 = vst [vmem:[#allocation2 + $0x48] sm:$0xff] 0.0
          %274 = vst [vmem:[#allocation2 + $0x50] sm:$0xff] 0.0
          %275 = vst [vmem:[#allocation2 + $0x58] sm:$0xff] 0.0
          %276 = vst [vmem:[#allocation2 + $0x60] sm:$0xff] 0.0
          %277 = vst [vmem:[#allocation2 + $0x68] sm:$0xff] 0.0
          %278 = vst [vmem:[#allocation2 + $0x70] sm:$0xff] 0.0
          %279 = vst [vmem:[#allocation2 + $0x78] sm:$0xff] 0.0
          %280 = vst [vmem:[#allocation2 + $0x80] sm:$0xff] 0.0
          %281 = vst [vmem:[#allocation2 + $0x88] sm:$0xff] 0.0
          %282 = vst [vmem:[#allocation2 + $0x90] sm:$0xff] 0.0
          %283 = vst [vmem:[#allocation2 + $0x98] sm:$0xff] 0.0
          %284 = vst [vmem:[#allocation2 + $0xa0] sm:$0xff] 0.0
          %285 = vst [vmem:[#allocation2 + $0xa8] sm:$0xff] 0.0
          %286 = vst [vmem:[#allocation2 + $0xb0] sm:$0xff] 0.0
          %287 = vst [vmem:[#allocation2 + $0xb8] sm:$0xff] 0.0
          %288 = vst [vmem:[#allocation2 + $0xc0] sm:$0xff] 0.0
          %289 = vst [vmem:[#allocation2 + $0xc8] sm:$0xff] 0.0
          %290 = vst [vmem:[#allocation2 + $0xd0] sm:$0xff] 0.0
          %291 = vst [vmem:[#allocation2 + $0xd8] sm:$0xff] 0.0
          %292 = vst [vmem:[#allocation2 + $0xe0] sm:$0xff] 0.0
          %293 = vst [vmem:[#allocation2 + $0xe8] sm:$0xff] 0.0
          %294 = vst [vmem:[#allocation2 + $0xf0] sm:$0xff] 0.0
          %295 = vst [vmem:[#allocation2 + $0xf8] sm:$0xff] 0.0
          %296 = vst [vmem:[#allocation2 + $0x100] sm:$0xff] 0.0
          %297 = vst [vmem:[#allocation2 + $0x108] sm:$0xff] 0.0
          %298 = vst [vmem:[#allocation2 + $0x110] sm:$0xff] 0.0
          %299 = vst [vmem:[#allocation2 + $0x118] sm:$0xff] 0.0
          %300 = vst [vmem:[#allocation2 + $0x120] sm:$0xff] 0.0
          %301 = vst [vmem:[#allocation2 + $0x128] sm:$0xff] 0.0
          %302 = vst [vmem:[#allocation2 + $0x130] sm:$0xff] 0.0
          %303 = vst [vmem:[#allocation2 + $0x138] sm:$0xff] 0.0
          %304 = vst [vmem:[#allocation2 + $0x140] sm:$0xff] 0.0
          %305 = vst [vmem:[#allocation2 + $0x148] sm:$0xff] 0.0
          %306 = vst [vmem:[#allocation2 + $0x150] sm:$0xff] 0.0
          %307 = vst [vmem:[#allocation2 + $0x158] sm:$0xff] 0.0
          %308 = vst [vmem:[#allocation2 + $0x160] sm:$0xff] 0.0
          %309 = vst [vmem:[#allocation2 + $0x168] sm:$0xff] 0.0
          %310 = vst [vmem:[#allocation2 + $0x170] sm:$0xff] 0.0
          %311 = vst [vmem:[#allocation2 + $0x178] sm:$0xff] 0.0
          %312 = vst [vmem:[#allocation2 + $0x180] sm:$0xff] 0.0
          %313 = vst [vmem:[#allocation2 + $0x188] sm:$0xff] 0.0
          %314 = vst [vmem:[#allocation2 + $0x190] sm:$0xff] 0.0
          %315 = vst [vmem:[#allocation2 + $0x198] sm:$0xff] 0.0
          %316 = vst [vmem:[#allocation2 + $0x1a0] sm:$0xff] 0.0
          %317 = vst [vmem:[#allocation2 + $0x1a8] sm:$0xff] 0.0
          %318 = vst [vmem:[#allocation2 + $0x1b0] sm:$0xff] 0.0
          %319 = vst [vmem:[#allocation2 + $0x1b8] sm:$0xff] 0.0
          %320 = vst [vmem:[#allocation2 + $0x1c0] sm:$0xff] 0.0
          %321 = vst [vmem:[#allocation2 + $0x1c8] sm:$0xff] 0.0
          %322 = vst [vmem:[#allocation2 + $0x1d0] sm:$0xff] 0.0
          %323 = vst [vmem:[#allocation2 + $0x1d8] sm:$0xff] 0.0
          %324 = vst [vmem:[#allocation2 + $0x1e0] sm:$0xff] 0.0
          %325 = vst [vmem:[#allocation2 + $0x1e8] sm:$0xff] 0.0
          %326 = vst [vmem:[#allocation2 + $0x1f0] sm:$0xff] 0.0
          %327 = vst [vmem:[#allocation2 + $0x1f8] sm:$0xff] 0.0
        $region44: #{tpu_custom_call.1} parent=31 // pred_fallthru
          _
        %v328 = vld [vmem:[#allocation2] sm:$0xff]
        %v329 = vld [vmem:[#allocation2 + $0x8] sm:$0xff]
        %v330 = vld [vmem:[#allocation2 + $0x10] sm:$0xff]
        %v331 = vld [vmem:[#allocation2 + $0x18] sm:$0xff]
        %v332 = vld [vmem:[#allocation2 + $0x20] sm:$0xff]
        %v333 = vld [vmem:[#allocation2 + $0x28] sm:$0xff]
        %v334 = vld [vmem:[#allocation2 + $0x30] sm:$0xff]
        %v335 = vld [vmem:[#allocation2 + $0x38] sm:$0xff]
        %v336 = vld [vmem:[#allocation2 + $0x40] sm:$0xff]
        %v337 = vld [vmem:[#allocation2 + $0x48] sm:$0xff]
        %v338 = vld [vmem:[#allocation2 + $0x50] sm:$0xff]
        %v339 = vld [vmem:[#allocation2 + $0x58] sm:$0xff]
        %v340 = vld [vmem:[#allocation2 + $0x60] sm:$0xff]
        %v341 = vld [vmem:[#allocation2 + $0x68] sm:$0xff]
        %v342 = vld [vmem:[#allocation2 + $0x70] sm:$0xff]
        %v343 = vld [vmem:[#allocation2 + $0x78] sm:$0xff]
        %v344 = vld [vmem:[#allocation2 + $0x80] sm:$0xff]
        %v345 = vld [vmem:[#allocation2 + $0x88] sm:$0xff]
        %v346 = vld [vmem:[#allocation2 + $0x90] sm:$0xff]
        %v347 = vld [vmem:[#allocation2 + $0x98] sm:$0xff]
        %v348 = vld [vmem:[#allocation2 + $0xa0] sm:$0xff]
        %v349 = vld [vmem:[#allocation2 + $0xa8] sm:$0xff]
        %v350 = vld [vmem:[#allocation2 + $0xb0] sm:$0xff]
        %v351 = vld [vmem:[#allocation2 + $0xb8] sm:$0xff]
        %v352 = vld [vmem:[#allocation2 + $0xc0] sm:$0xff]
        %v353 = vld [vmem:[#allocation2 + $0xc8] sm:$0xff]
        %v354 = vld [vmem:[#allocation2 + $0xd0] sm:$0xff]
        %v355 = vld [vmem:[#allocation2 + $0xd8] sm:$0xff]
        %v356 = vld [vmem:[#allocation2 + $0xe0] sm:$0xff]
        %v357 = vld [vmem:[#allocation2 + $0xe8] sm:$0xff]
        %v358 = vld [vmem:[#allocation2 + $0xf0] sm:$0xff]
        %v359 = vld [vmem:[#allocation2 + $0xf8] sm:$0xff]
        %v360 = vld [vmem:[#allocation2 + $0x100] sm:$0xff]
        %v361 = vld [vmem:[#allocation2 + $0x108] sm:$0xff]
        %v362 = vld [vmem:[#allocation2 + $0x110] sm:$0xff]
        %v363 = vld [vmem:[#allocation2 + $0x118] sm:$0xff]
        %v364 = vld [vmem:[#allocation2 + $0x120] sm:$0xff]
        %v365 = vld [vmem:[#allocation2 + $0x128] sm:$0xff]
        %v366 = vld [vmem:[#allocation2 + $0x130] sm:$0xff]
        %v367 = vld [vmem:[#allocation2 + $0x138] sm:$0xff]
        %v368 = vld [vmem:[#allocation2 + $0x140] sm:$0xff]
        %v369 = vld [vmem:[#allocation2 + $0x148] sm:$0xff]
        %v370 = vld [vmem:[#allocation2 + $0x150] sm:$0xff]
        %v371 = vld [vmem:[#allocation2 + $0x158] sm:$0xff]
        %v372 = vld [vmem:[#allocation2 + $0x160] sm:$0xff]
        %v373 = vld [vmem:[#allocation2 + $0x168] sm:$0xff]
        %v374 = vld [vmem:[#allocation2 + $0x170] sm:$0xff]
        %v375 = vld [vmem:[#allocation2 + $0x178] sm:$0xff]
        %v376 = vld [vmem:[#allocation2 + $0x180] sm:$0xff]
        %v377 = vld [vmem:[#allocation2 + $0x188] sm:$0xff]
        %v378 = vld [vmem:[#allocation2 + $0x190] sm:$0xff]
        %v379 = vld [vmem:[#allocation2 + $0x198] sm:$0xff]
        %v380 = vld [vmem:[#allocation2 + $0x1a0] sm:$0xff]
        %v381 = vld [vmem:[#allocation2 + $0x1a8] sm:$0xff]
        %v382 = vld [vmem:[#allocation2 + $0x1b0] sm:$0xff]
        %v383 = vld [vmem:[#allocation2 + $0x1b8] sm:$0xff]
        %v384 = vld [vmem:[#allocation2 + $0x1c0] sm:$0xff]
        %v385 = vld [vmem:[#allocation2 + $0x1c8] sm:$0xff]
        %v386 = vld [vmem:[#allocation2 + $0x1d0] sm:$0xff]
        %v387 = vld [vmem:[#allocation2 + $0x1d8] sm:$0xff]
        %v388 = vld [vmem:[#allocation2 + $0x1e0] sm:$0xff]
        %v389 = vld [vmem:[#allocation2 + $0x1e8] sm:$0xff]
        %v390 = vld [vmem:[#allocation2 + $0x1f0] sm:$0xff]
        %v391 = vld [vmem:[#allocation2 + $0x1f8] sm:$0xff]
        %v392 = vld [vmem:[%s222] sm:$0xff]
        %v393 = vld [vmem:[%s222 + $0x8] sm:$0xff]
        %v394 = vld [vmem:[%s222 + $0x10] sm:$0xff]
        %v395 = vld [vmem:[%s222 + $0x18] sm:$0xff]
        %v396 = vld [vmem:[%s222 + $0x20] sm:$0xff]
        %v397 = vld [vmem:[%s222 + $0x28] sm:$0xff]
        %v398 = vld [vmem:[%s222 + $0x30] sm:$0xff]
        %v399 = vld [vmem:[%s222 + $0x38] sm:$0xff]
        %v400 = vld [vmem:[%s222 + $0x40] sm:$0xff]
        %v401 = vld [vmem:[%s222 + $0x48] sm:$0xff]
        %v402 = vld [vmem:[%s222 + $0x50] sm:$0xff]
        %v403 = vld [vmem:[%s222 + $0x58] sm:$0xff]
        %v404 = vld [vmem:[%s222 + $0x60] sm:$0xff]
        %v405 = vld [vmem:[%s222 + $0x68] sm:$0xff]
        %v406 = vld [vmem:[%s222 + $0x70] sm:$0xff]
        %v407 = vld [vmem:[%s222 + $0x78] sm:$0xff]
        %v408 = vld [vmem:[%s222 + $0x80] sm:$0xff]
        %v409 = vld [vmem:[%s222 + $0x88] sm:$0xff]
        %v410 = vld [vmem:[%s222 + $0x90] sm:$0xff]
        %v411 = vld [vmem:[%s222 + $0x98] sm:$0xff]
        %v412 = vld [vmem:[%s222 + $0xa0] sm:$0xff]
        %v413 = vld [vmem:[%s222 + $0xa8] sm:$0xff]
        %v414 = vld [vmem:[%s222 + $0xb0] sm:$0xff]
        %v415 = vld [vmem:[%s222 + $0xb8] sm:$0xff]
        %v416 = vld [vmem:[%s222 + $0xc0] sm:$0xff]
        %v417 = vld [vmem:[%s222 + $0xc8] sm:$0xff]
        %v418 = vld [vmem:[%s222 + $0xd0] sm:$0xff]
        %v419 = vld [vmem:[%s222 + $0xd8] sm:$0xff]
        %v420 = vld [vmem:[%s222 + $0xe0] sm:$0xff]
        %v421 = vld [vmem:[%s222 + $0xe8] sm:$0xff]
        %v422 = vld [vmem:[%s222 + $0xf0] sm:$0xff]
        %v423 = vld [vmem:[%s222 + $0xf8] sm:$0xff]
        %v424 = vld [vmem:[%s222 + $0x100] sm:$0xff]
        %v425 = vld [vmem:[%s222 + $0x108] sm:$0xff]
        %v426 = vld [vmem:[%s222 + $0x110] sm:$0xff]
        %v427 = vld [vmem:[%s222 + $0x118] sm:$0xff]
        %v428 = vld [vmem:[%s222 + $0x120] sm:$0xff]
        %v429 = vld [vmem:[%s222 + $0x128] sm:$0xff]
        %v430 = vld [vmem:[%s222 + $0x130] sm:$0xff]
        %v431 = vld [vmem:[%s222 + $0x138] sm:$0xff]
        %v432 = vld [vmem:[%s222 + $0x140] sm:$0xff]
        %v433 = vld [vmem:[%s222 + $0x148] sm:$0xff]
        %v434 = vld [vmem:[%s222 + $0x150] sm:$0xff]
        %v435 = vld [vmem:[%s222 + $0x158] sm:$0xff]
        %v436 = vld [vmem:[%s222 + $0x160] sm:$0xff]
        %v437 = vld [vmem:[%s222 + $0x168] sm:$0xff]
        %v438 = vld [vmem:[%s222 + $0x170] sm:$0xff]
        %v439 = vld [vmem:[%s222 + $0x178] sm:$0xff]
        %v440 = vld [vmem:[%s222 + $0x180] sm:$0xff]
        %v441 = vld [vmem:[%s222 + $0x188] sm:$0xff]
        %v442 = vld [vmem:[%s222 + $0x190] sm:$0xff]
        %v443 = vld [vmem:[%s222 + $0x198] sm:$0xff]
        %v444 = vld [vmem:[%s222 + $0x1a0] sm:$0xff]
        %v445 = vld [vmem:[%s222 + $0x1a8] sm:$0xff]
        %v446 = vld [vmem:[%s222 + $0x1b0] sm:$0xff]
        %v447 = vld [vmem:[%s222 + $0x1b8] sm:$0xff]
        %v448 = vld [vmem:[%s222 + $0x1c0] sm:$0xff]
        %v449 = vld [vmem:[%s222 + $0x1c8] sm:$0xff]
        %v450 = vld [vmem:[%s222 + $0x1d0] sm:$0xff]
        %v451 = vld [vmem:[%s222 + $0x1d8] sm:$0xff]
        %v452 = vld [vmem:[%s222 + $0x1e0] sm:$0xff]
        %v453 = vld [vmem:[%s222 + $0x1e8] sm:$0xff]
        %v454 = vld [vmem:[%s222 + $0x1f0] sm:$0xff]
        %v455 = vld [vmem:[%s222 + $0x1f8] sm:$0xff]
        %v456 = vld [vmem:[#allocation6] sm:$0xf]
        %v457 = vld [vmem:[#allocation6 + $0x4] sm:$0xf]
        %v458 = vld [vmem:[#allocation6 + $0x8] sm:$0xf]
        %v459 = vld [vmem:[#allocation6 + $0xc] sm:$0xf]
        %v460 = vld [vmem:[#allocation6 + $0x10] sm:$0xf]
        %v461 = vld [vmem:[#allocation6 + $0x14] sm:$0xf]
        %v462 = vld [vmem:[#allocation6 + $0x18] sm:$0xf]
        %v463 = vld [vmem:[#allocation6 + $0x1c] sm:$0xf]
        %v464 = vld [vmem:[#allocation6 + $0x20] sm:$0xf]
        %v465 = vld [vmem:[#allocation6 + $0x24] sm:$0xf]
        %v466 = vld [vmem:[#allocation6 + $0x28] sm:$0xf]
        %v467 = vld [vmem:[#allocation6 + $0x2c] sm:$0xf]
        %v468 = vld [vmem:[#allocation6 + $0x30] sm:$0xf]
        %v469 = vld [vmem:[#allocation6 + $0x34] sm:$0xf]
        %v470 = vld [vmem:[#allocation6 + $0x38] sm:$0xf]
        %v471 = vld [vmem:[#allocation6 + $0x3c] sm:$0xf]
        %v472 = vld [vmem:[#allocation6 + $0x40] sm:$0xf]
        %v473 = vld [vmem:[#allocation6 + $0x44] sm:$0xf]
        %v474 = vld [vmem:[#allocation6 + $0x48] sm:$0xf]
        %v475 = vld [vmem:[#allocation6 + $0x4c] sm:$0xf]
        %v476 = vld [vmem:[#allocation6 + $0x50] sm:$0xf]
        %v477 = vld [vmem:[#allocation6 + $0x54] sm:$0xf]
        %v478 = vld [vmem:[#allocation6 + $0x58] sm:$0xf]
        %v479 = vld [vmem:[#allocation6 + $0x5c] sm:$0xf]
        %v480 = vld [vmem:[#allocation6 + $0x60] sm:$0xf]
        %v481 = vld [vmem:[#allocation6 + $0x64] sm:$0xf]
        %v482 = vld [vmem:[#allocation6 + $0x68] sm:$0xf]
        %v483 = vld [vmem:[#allocation6 + $0x6c] sm:$0xf]
        %v484 = vld [vmem:[#allocation6 + $0x70] sm:$0xf]
        %v485 = vld [vmem:[#allocation6 + $0x74] sm:$0xf]
        %v486 = vld [vmem:[#allocation6 + $0x78] sm:$0xf]
        %v487 = vld [vmem:[#allocation6 + $0x7c] sm:$0xf]
        %v552 = vunpack.c.l.b16 %v392
        %v553 = vunpack.c.h.b16 %v392
        %v554 = vunpack.c.l.b16 %v393
        %v555 = vunpack.c.h.b16 %v393
        %v556 = vunpack.c.l.b16 %v394
        %v557 = vunpack.c.h.b16 %v394
        %v558 = vunpack.c.l.b16 %v395
        %v559 = vunpack.c.h.b16 %v395
        %v560 = vunpack.c.l.b16 %v396
        %v561 = vunpack.c.h.b16 %v396
        %v562 = vunpack.c.l.b16 %v397
        %v563 = vunpack.c.h.b16 %v397
        %v564 = vunpack.c.l.b16 %v398
        %v565 = vunpack.c.h.b16 %v398
        %v566 = vunpack.c.l.b16 %v399
        %v567 = vunpack.c.h.b16 %v399
        %v568 = vunpack.c.l.b16 %v400
        %v569 = vunpack.c.h.b16 %v400
        %v570 = vunpack.c.l.b16 %v401
        %v571 = vunpack.c.h.b16 %v401
        %v572 = vunpack.c.l.b16 %v402
        %v573 = vunpack.c.h.b16 %v402
        %v574 = vunpack.c.l.b16 %v403
        %v575 = vunpack.c.h.b16 %v403
        %v576 = vunpack.c.l.b16 %v404
        %v577 = vunpack.c.h.b16 %v404
        %v578 = vunpack.c.l.b16 %v405
        %v579 = vunpack.c.h.b16 %v405
        %v580 = vunpack.c.l.b16 %v406
        %v581 = vunpack.c.h.b16 %v406
        %v582 = vunpack.c.l.b16 %v407
        %v583 = vunpack.c.h.b16 %v407
        %v584 = vunpack.c.l.b16 %v408
        %v585 = vunpack.c.h.b16 %v408
        %v586 = vunpack.c.l.b16 %v409
        %v587 = vunpack.c.h.b16 %v409
        %v588 = vunpack.c.l.b16 %v410
        %v589 = vunpack.c.h.b16 %v410
        %v590 = vunpack.c.l.b16 %v411
        %v591 = vunpack.c.h.b16 %v411
        %v592 = vunpack.c.l.b16 %v412
        %v593 = vunpack.c.h.b16 %v412
        %v594 = vunpack.c.l.b16 %v413
        %v595 = vunpack.c.h.b16 %v413
        %v596 = vunpack.c.l.b16 %v414
        %v597 = vunpack.c.h.b16 %v414
        %v598 = vunpack.c.l.b16 %v415
        %v599 = vunpack.c.h.b16 %v415
        %v600 = vunpack.c.l.b16 %v416
        %v601 = vunpack.c.h.b16 %v416
        %v602 = vunpack.c.l.b16 %v417
        %v603 = vunpack.c.h.b16 %v417
        %v604 = vunpack.c.l.b16 %v418
        %v605 = vunpack.c.h.b16 %v418
        %v606 = vunpack.c.l.b16 %v419
        %v607 = vunpack.c.h.b16 %v419
        %v608 = vunpack.c.l.b16 %v420
        %v609 = vunpack.c.h.b16 %v420
        %v610 = vunpack.c.l.b16 %v421
        %v611 = vunpack.c.h.b16 %v421
        %v612 = vunpack.c.l.b16 %v422
        %v613 = vunpack.c.h.b16 %v422
        %v614 = vunpack.c.l.b16 %v423
        %v615 = vunpack.c.h.b16 %v423
        %v616 = vunpack.c.l.b16 %v424
        %v617 = vunpack.c.h.b16 %v424
        %v618 = vunpack.c.l.b16 %v425
        %v619 = vunpack.c.h.b16 %v425
        %v620 = vunpack.c.l.b16 %v426
        %v621 = vunpack.c.h.b16 %v426
        %v622 = vunpack.c.l.b16 %v427
        %v623 = vunpack.c.h.b16 %v427
        %v624 = vunpack.c.l.b16 %v428
        %v625 = vunpack.c.h.b16 %v428
        %v626 = vunpack.c.l.b16 %v429
        %v627 = vunpack.c.h.b16 %v429
        %v628 = vunpack.c.l.b16 %v430
        %v629 = vunpack.c.h.b16 %v430
        %v630 = vunpack.c.l.b16 %v431
        %v631 = vunpack.c.h.b16 %v431
        %v632 = vunpack.c.l.b16 %v432
        %v633 = vunpack.c.h.b16 %v432
        %v634 = vunpack.c.l.b16 %v433
        %v635 = vunpack.c.h.b16 %v433
        %v636 = vunpack.c.l.b16 %v434
        %v637 = vunpack.c.h.b16 %v434
        %v638 = vunpack.c.l.b16 %v435
        %v639 = vunpack.c.h.b16 %v435
        %v640 = vunpack.c.l.b16 %v436
        %v641 = vunpack.c.h.b16 %v436
        %v642 = vunpack.c.l.b16 %v437
        %v643 = vunpack.c.h.b16 %v437
        %v644 = vunpack.c.l.b16 %v438
        %v645 = vunpack.c.h.b16 %v438
        %v646 = vunpack.c.l.b16 %v439
        %v647 = vunpack.c.h.b16 %v439
        %v648 = vunpack.c.l.b16 %v440
        %v649 = vunpack.c.h.b16 %v440
        %v650 = vunpack.c.l.b16 %v441
        %v651 = vunpack.c.h.b16 %v441
        %v652 = vunpack.c.l.b16 %v442
        %v653 = vunpack.c.h.b16 %v442
        %v654 = vunpack.c.l.b16 %v443
        %v655 = vunpack.c.h.b16 %v443
        %v656 = vunpack.c.l.b16 %v444
        %v657 = vunpack.c.h.b16 %v444
        %v658 = vunpack.c.l.b16 %v445
        %v659 = vunpack.c.h.b16 %v445
        %v660 = vunpack.c.l.b16 %v446
        %v661 = vunpack.c.h.b16 %v446
        %v662 = vunpack.c.l.b16 %v447
        %v663 = vunpack.c.h.b16 %v447
        %v664 = vunpack.c.l.b16 %v448
        %v665 = vunpack.c.h.b16 %v448
        %v666 = vunpack.c.l.b16 %v449
        %v667 = vunpack.c.h.b16 %v449
        %v668 = vunpack.c.l.b16 %v450
        %v669 = vunpack.c.h.b16 %v450
        %v670 = vunpack.c.l.b16 %v451
        %v671 = vunpack.c.h.b16 %v451
        %v672 = vunpack.c.l.b16 %v452
        %v673 = vunpack.c.h.b16 %v452
        %v674 = vunpack.c.l.b16 %v453
        %v675 = vunpack.c.h.b16 %v453
        %v676 = vunpack.c.l.b16 %v454
        %v677 = vunpack.c.h.b16 %v454
        %v678 = vunpack.c.l.b16 %v455
        %v679 = vunpack.c.h.b16 %v455
        %v680 = vpack.c.b16 %v554, %v552
        %v681 = vpack.c.b16 %v555, %v553
        %v682 = vpack.c.b16 %v558, %v556
        %v683 = vpack.c.b16 %v559, %v557
        %v684 = vpack.c.b16 %v562, %v560
        %v685 = vpack.c.b16 %v563, %v561
        %v686 = vpack.c.b16 %v566, %v564
        %v687 = vpack.c.b16 %v567, %v565
        %v688 = vpack.c.b16 %v570, %v568
        %v689 = vpack.c.b16 %v571, %v569
        %v690 = vpack.c.b16 %v574, %v572
        %v691 = vpack.c.b16 %v575, %v573
        %v692 = vpack.c.b16 %v578, %v576
        %v693 = vpack.c.b16 %v579, %v577
        %v694 = vpack.c.b16 %v582, %v580
        %v695 = vpack.c.b16 %v583, %v581
        %v696 = vpack.c.b16 %v586, %v584
        %v697 = vpack.c.b16 %v587, %v585
        %v698 = vpack.c.b16 %v590, %v588
        %v699 = vpack.c.b16 %v591, %v589
        %v700 = vpack.c.b16 %v594, %v592
        %v701 = vpack.c.b16 %v595, %v593
        %v702 = vpack.c.b16 %v598, %v596
        %v703 = vpack.c.b16 %v599, %v597
        %v704 = vpack.c.b16 %v602, %v600
        %v705 = vpack.c.b16 %v603, %v601
        %v706 = vpack.c.b16 %v606, %v604
        %v707 = vpack.c.b16 %v607, %v605
        %v708 = vpack.c.b16 %v610, %v608
        %v709 = vpack.c.b16 %v611, %v609
        %v710 = vpack.c.b16 %v614, %v612
        %v711 = vpack.c.b16 %v615, %v613
        %v712 = vpack.c.b16 %v618, %v616
        %v713 = vpack.c.b16 %v619, %v617
        %v714 = vpack.c.b16 %v622, %v620
        %v715 = vpack.c.b16 %v623, %v621
        %v716 = vpack.c.b16 %v626, %v624
        %v717 = vpack.c.b16 %v627, %v625
        %v718 = vpack.c.b16 %v630, %v628
        %v719 = vpack.c.b16 %v631, %v629
        %v720 = vpack.c.b16 %v634, %v632
        %v721 = vpack.c.b16 %v635, %v633
        %v722 = vpack.c.b16 %v638, %v636
        %v723 = vpack.c.b16 %v639, %v637
        %v724 = vpack.c.b16 %v642, %v640
        %v725 = vpack.c.b16 %v643, %v641
        %v726 = vpack.c.b16 %v646, %v644
        %v727 = vpack.c.b16 %v647, %v645
        %v728 = vpack.c.b16 %v650, %v648
        %v729 = vpack.c.b16 %v651, %v649
        %v730 = vpack.c.b16 %v654, %v652
        %v731 = vpack.c.b16 %v655, %v653
        %v732 = vpack.c.b16 %v658, %v656
        %v733 = vpack.c.b16 %v659, %v657
        %v734 = vpack.c.b16 %v662, %v660
        %v735 = vpack.c.b16 %v663, %v661
        %v736 = vpack.c.b16 %v666, %v664
        %v737 = vpack.c.b16 %v667, %v665
        %v738 = vpack.c.b16 %v670, %v668
        %v739 = vpack.c.b16 %v671, %v669
        %v740 = vpack.c.b16 %v674, %v672
        %v741 = vpack.c.b16 %v675, %v673
        %v742 = vpack.c.b16 %v678, %v676
        %v743 = vpack.c.b16 %v679, %v677
        %v840 = vunpack.c.l.b16 %v456
        %v841 = vunpack.c.l.b16 %v457
        %v842 = vunpack.c.l.b16 %v458
        %v843 = vunpack.c.l.b16 %v459
        %v844 = vunpack.c.l.b16 %v460
        %v845 = vunpack.c.l.b16 %v461
        %v846 = vunpack.c.l.b16 %v462
        %v847 = vunpack.c.l.b16 %v463
        %v848 = vunpack.c.l.b16 %v464
        %v849 = vunpack.c.l.b16 %v465
        %v850 = vunpack.c.l.b16 %v466
        %v851 = vunpack.c.l.b16 %v467
        %v852 = vunpack.c.l.b16 %v468
        %v853 = vunpack.c.l.b16 %v469
        %v854 = vunpack.c.l.b16 %v470
        %v855 = vunpack.c.l.b16 %v471
        %v856 = vunpack.c.l.b16 %v472
        %v857 = vunpack.c.l.b16 %v473
        %v858 = vunpack.c.l.b16 %v474
        %v859 = vunpack.c.l.b16 %v475
        %v860 = vunpack.c.l.b16 %v476
        %v861 = vunpack.c.l.b16 %v477
        %v862 = vunpack.c.l.b16 %v478
        %v863 = vunpack.c.l.b16 %v479
        %v864 = vunpack.c.l.b16 %v480
        %v865 = vunpack.c.l.b16 %v481
        %v866 = vunpack.c.l.b16 %v482
        %v867 = vunpack.c.l.b16 %v483
        %v868 = vunpack.c.l.b16 %v484
        %v869 = vunpack.c.l.b16 %v485
        %v870 = vunpack.c.l.b16 %v486
        %v871 = vunpack.c.l.b16 %v487
        %v872 = vpack.c.b16 %v841, %v840
        %v873 = vpack.c.b16 %v843, %v842
        %v874 = vpack.c.b16 %v845, %v844
        %v875 = vpack.c.b16 %v847, %v846
        %v876 = vpack.c.b16 %v849, %v848
        %v877 = vpack.c.b16 %v851, %v850
        %v878 = vpack.c.b16 %v853, %v852
        %v879 = vpack.c.b16 %v855, %v854
        %v880 = vpack.c.b16 %v857, %v856
        %v881 = vpack.c.b16 %v859, %v858
        %v882 = vpack.c.b16 %v861, %v860
        %v883 = vpack.c.b16 %v863, %v862
        %v884 = vpack.c.b16 %v865, %v864
        %v885 = vpack.c.b16 %v867, %v866
        %v886 = vpack.c.b16 %v869, %v868
        %v887 = vpack.c.b16 %v871, %v870
        %904 = vmatprep.subr.bf16.mxu0 0
        %905 = vmatpush1.bf16.msra.mxu0 %v872
        %906 = vmatprep.subr.bf16.mxu0 0
        %907 = vmatpush1.bf16.msra.mxu0 %v873
        %908 = vmatprep.subr.bf16.mxu0 0
        %909 = vmatpush1.bf16.msra.mxu0 %v874
        %910 = vmatprep.subr.bf16.mxu0 0
        %911 = vmatpush1.bf16.msra.mxu0 %v875
        %912 = vmatprep.subr.bf16.mxu0 0
        %913 = vmatpush1.bf16.msra.mxu0 %v876
        %914 = vmatprep.subr.bf16.mxu0 0
        %915 = vmatpush1.bf16.msra.mxu0 %v877
        %916 = vmatprep.subr.bf16.mxu0 0
        %917 = vmatpush1.bf16.msra.mxu0 %v878
        %918 = vmatprep.subr.bf16.mxu0 0
        %919 = vmatpush1.bf16.msra.mxu0 %v879
        %920 = vmatprep.subr.bf16.mxu0 0
        %921 = vmatpush1.bf16.msra.mxu0 %v880
        %922 = vmatprep.subr.bf16.mxu0 0
        %923 = vmatpush1.bf16.msra.mxu0 %v881
        %924 = vmatprep.subr.bf16.mxu0 0
        %925 = vmatpush1.bf16.msra.mxu0 %v882
        %926 = vmatprep.subr.bf16.mxu0 0
        %927 = vmatpush1.bf16.msra.mxu0 %v883
        %928 = vmatprep.subr.bf16.mxu0 0
        %929 = vmatpush1.bf16.msra.mxu0 %v884
        %930 = vmatprep.subr.bf16.mxu0 0
        %931 = vmatpush1.bf16.msra.mxu0 %v885
        %932 = vmatprep.subr.bf16.mxu0 0
        %933 = vmatpush1.bf16.msra.mxu0 %v886
        %934 = vmatprep.subr.bf16.mxu0 0
        %935 = vmatpush1.bf16.msra.mxu0 %v887
        %936 = vmatprep.mubr.bf16.mxu0 %v681
        %937 = vmatmul.mubr.bf16.gmra.mrb[0].mxu0 %v680
        %v938 = vpop.f32.mrb[0].mxu0
        %v939 = vadd.f32 0.0, %v938
        %v940 = vpop.f32.mrb[0].mxu0
        %v941 = vpop.f32.mrb[0].mxu0
        %v942 = vadd.f32 0.0, %v941
        %v943 = vpop.f32.mrb[0].mxu0
        %944 = vmatprep.mubr.bf16.mxu0 %v683
        %945 = vmatmul.mubr.bf16.gmra.mrb[0].mxu0 %v682
        %v946 = vpop.f32.mrb[0].mxu0
        %v947 = vadd.f32 0.0, %v946
        %v948 = vpop.f32.mrb[0].mxu0
        %v949 = vpop.f32.mrb[0].mxu0
        %v950 = vadd.f32 0.0, %v949
        %v951 = vpop.f32.mrb[0].mxu0
        %952 = vmatprep.mubr.bf16.mxu0 %v685
        %953 = vmatmul.mubr.bf16.gmra.mrb[0].mxu0 %v684
        %v954 = vpop.f32.mrb[0].mxu0
        %v955 = vadd.f32 0.0, %v954
        %v956 = vpop.f32.mrb[0].mxu0
        %v957 = vpop.f32.mrb[0].mxu0
        %v958 = vadd.f32 0.0, %v957
        %v959 = vpop.f32.mrb[0].mxu0
        %960 = vmatprep.mubr.bf16.mxu0 %v687
        %961 = vmatmul.mubr.bf16.gmra.mrb[0].mxu0 %v686
        %v962 = vpop.f32.mrb[0].mxu0
        %v963 = vadd.f32 0.0, %v962
        %v964 = vpop.f32.mrb[0].mxu0
        %v965 = vpop.f32.mrb[0].mxu0
        %v966 = vadd.f32 0.0, %v965
        %v967 = vpop.f32.mrb[0].mxu0
        %968 = vmatprep.mubr.bf16.mxu0 %v689
        %969 = vmatmul.mubr.bf16.gmra.mrb[0].mxu0 %v688
        %v970 = vpop.f32.mrb[0].mxu0
        %v971 = vadd.f32 0.0, %v970
        %v972 = vpop.f32.mrb[0].mxu0
        %v973 = vpop.f32.mrb[0].mxu0
        %v974 = vadd.f32 0.0, %v973
        %v975 = vpop.f32.mrb[0].mxu0
        %976 = vmatprep.mubr.bf16.mxu0 %v691
        %977 = vmatmul.mubr.bf16.gmra.mrb[0].mxu0 %v690
        %v978 = vpop.f32.mrb[0].mxu0
        %v979 = vadd.f32 0.0, %v978
        %v980 = vpop.f32.mrb[0].mxu0
        %v981 = vpop.f32.mrb[0].mxu0
        %v982 = vadd.f32 0.0, %v981
        %v983 = vpop.f32.mrb[0].mxu0
        %984 = vmatprep.mubr.bf16.mxu0 %v693
        %985 = vmatmul.mubr.bf16.gmra.mrb[0].mxu0 %v692
        %v986 = vpop.f32.mrb[0].mxu0
        %v987 = vadd.f32 0.0, %v986
        %v988 = vpop.f32.mrb[0].mxu0
        %v989 = vpop.f32.mrb[0].mxu0
        %v990 = vadd.f32 0.0, %v989
        %v991 = vpop.f32.mrb[0].mxu0
        %992 = vmatprep.mubr.bf16.mxu0 %v695
        %993 = vmatmul.mubr.bf16.gmra.mrb[0].mxu0 %v694
        %v994 = vpop.f32.mrb[0].mxu0
        %v995 = vadd.f32 0.0, %v994
        %v996 = vpop.f32.mrb[0].mxu0
        %v997 = vpop.f32.mrb[0].mxu0
        %v998 = vadd.f32 0.0, %v997
        %v999 = vpop.f32.mrb[0].mxu0
        %1000 = vmatprep.mubr.bf16.mxu0 %v697
        %1001 = vmatmul.mubr.bf16.gmra.mrb[0].mxu0 %v696
        %v1002 = vpop.f32.mrb[0].mxu0
        %v1003 = vadd.f32 0.0, %v1002
        %v1004 = vpop.f32.mrb[0].mxu0
        %v1005 = vpop.f32.mrb[0].mxu0
        %v1006 = vadd.f32 0.0, %v1005
        %v1007 = vpop.f32.mrb[0].mxu0
        %1008 = vmatprep.mubr.bf16.mxu0 %v699
        %1009 = vmatmul.mubr.bf16.gmra.mrb[0].mxu0 %v698
        %v1010 = vpop.f32.mrb[0].mxu0
        %v1011 = vadd.f32 0.0, %v1010
        %v1012 = vpop.f32.mrb[0].mxu0
        %v1013 = vpop.f32.mrb[0].mxu0
        %v1014 = vadd.f32 0.0, %v1013
        %v1015 = vpop.f32.mrb[0].mxu0
        %1016 = vmatprep.mubr.bf16.mxu0 %v701
        %1017 = vmatmul.mubr.bf16.gmra.mrb[0].mxu0 %v700
        %v1018 = vpop.f32.mrb[0].mxu0
        %v1019 = vadd.f32 0.0, %v1018
        %v1020 = vpop.f32.mrb[0].mxu0
        %v1021 = vpop.f32.mrb[0].mxu0
        %v1022 = vadd.f32 0.0, %v1021
        %v1023 = vpop.f32.mrb[0].mxu0
        %1024 = vmatprep.mubr.bf16.mxu0 %v703
        %1025 = vmatmul.mubr.bf16.gmra.mrb[0].mxu0 %v702
        %v1026 = vpop.f32.mrb[0].mxu0
        %v1027 = vadd.f32 0.0, %v1026
        %v1028 = vpop.f32.mrb[0].mxu0
        %v1029 = vpop.f32.mrb[0].mxu0
        %v1030 = vadd.f32 0.0, %v1029
        %v1031 = vpop.f32.mrb[0].mxu0
        %1032 = vmatprep.mubr.bf16.mxu0 %v705
        %1033 = vmatmul.mubr.bf16.gmra.mrb[0].mxu0 %v704
        %v1034 = vpop.f32.mrb[0].mxu0
        %v1035 = vadd.f32 0.0, %v1034
        %v1036 = vpop.f32.mrb[0].mxu0
        %v1037 = vpop.f32.mrb[0].mxu0
        %v1038 = vadd.f32 0.0, %v1037
        %v1039 = vpop.f32.mrb[0].mxu0
        %1040 = vmatprep.mubr.bf16.mxu0 %v707
        %1041 = vmatmul.mubr.bf16.gmra.mrb[0].mxu0 %v706
        %v1042 = vpop.f32.mrb[0].mxu0
        %v1043 = vadd.f32 0.0, %v1042
        %v1044 = vpop.f32.mrb[0].mxu0
        %v1045 = vpop.f32.mrb[0].mxu0
        %v1046 = vadd.f32 0.0, %v1045
        %v1047 = vpop.f32.mrb[0].mxu0
        %1048 = vmatprep.mubr.bf16.mxu0 %v709
        %1049 = vmatmul.mubr.bf16.gmra.mrb[0].mxu0 %v708
        %v1050 = vpop.f32.mrb[0].mxu0
        %v1051 = vadd.f32 0.0, %v1050
        %v1052 = vpop.f32.mrb[0].mxu0
        %v1053 = vpop.f32.mrb[0].mxu0
        %v1054 = vadd.f32 0.0, %v1053
        %v1055 = vpop.f32.mrb[0].mxu0
        %1056 = vmatprep.mubr.bf16.mxu0 %v711
        %1057 = vmatmul.mubr.bf16.gmra.mrb[0].mxu0 %v710
        %v1058 = vpop.f32.mrb[0].mxu0
        %v1059 = vadd.f32 0.0, %v1058
        %v1060 = vpop.f32.mrb[0].mxu0
        %v1061 = vpop.f32.mrb[0].mxu0
        %v1062 = vadd.f32 0.0, %v1061
        %v1063 = vpop.f32.mrb[0].mxu0
        %1064 = vmatprep.mubr.bf16.mxu0 %v713
        %1065 = vmatmul.mubr.bf16.gmra.mrb[0].mxu0 %v712
        %v1066 = vpop.f32.mrb[0].mxu0
        %v1067 = vadd.f32 0.0, %v1066
        %v1068 = vpop.f32.mrb[0].mxu0
        %v1069 = vpop.f32.mrb[0].mxu0
        %v1070 = vadd.f32 0.0, %v1069
        %v1071 = vpop.f32.mrb[0].mxu0
        %1072 = vmatprep.mubr.bf16.mxu0 %v715
        %1073 = vmatmul.mubr.bf16.gmra.mrb[0].mxu0 %v714
        %v1074 = vpop.f32.mrb[0].mxu0
        %v1075 = vadd.f32 0.0, %v1074
        %v1076 = vpop.f32.mrb[0].mxu0
        %v1077 = vpop.f32.mrb[0].mxu0
        %v1078 = vadd.f32 0.0, %v1077
        %v1079 = vpop.f32.mrb[0].mxu0
        %1080 = vmatprep.mubr.bf16.mxu0 %v717
        %1081 = vmatmul.mubr.bf16.gmra.mrb[0].mxu0 %v716
        %v1082 = vpop.f32.mrb[0].mxu0
        %v1083 = vadd.f32 0.0, %v1082
        %v1084 = vpop.f32.mrb[0].mxu0
        %v1085 = vpop.f32.mrb[0].mxu0
        %v1086 = vadd.f32 0.0, %v1085
        %v1087 = vpop.f32.mrb[0].mxu0
        %1088 = vmatprep.mubr.bf16.mxu0 %v719
        %1089 = vmatmul.mubr.bf16.gmra.mrb[0].mxu0 %v718
        %v1090 = vpop.f32.mrb[0].mxu0
        %v1091 = vadd.f32 0.0, %v1090
        %v1092 = vpop.f32.mrb[0].mxu0
        %v1093 = vpop.f32.mrb[0].mxu0
        %v1094 = vadd.f32 0.0, %v1093
        %v1095 = vpop.f32.mrb[0].mxu0
        %1096 = vmatprep.mubr.bf16.mxu0 %v721
        %1097 = vmatmul.mubr.bf16.gmra.mrb[0].mxu0 %v720
        %v1098 = vpop.f32.mrb[0].mxu0
        %v1099 = vadd.f32 0.0, %v1098
        %v1100 = vpop.f32.mrb[0].mxu0
        %v1101 = vpop.f32.mrb[0].mxu0
        %v1102 = vadd.f32 0.0, %v1101
        %v1103 = vpop.f32.mrb[0].mxu0
        %1104 = vmatprep.mubr.bf16.mxu0 %v723
        %1105 = vmatmul.mubr.bf16.gmra.mrb[0].mxu0 %v722
        %v1106 = vpop.f32.mrb[0].mxu0
        %v1107 = vadd.f32 0.0, %v1106
        %v1108 = vpop.f32.mrb[0].mxu0
        %v1109 = vpop.f32.mrb[0].mxu0
        %v1110 = vadd.f32 0.0, %v1109
        %v1111 = vpop.f32.mrb[0].mxu0
        %1112 = vmatprep.mubr.bf16.mxu0 %v725
        %1113 = vmatmul.mubr.bf16.gmra.mrb[0].mxu0 %v724
        %v1114 = vpop.f32.mrb[0].mxu0
        %v1115 = vadd.f32 0.0, %v1114
        %v1116 = vpop.f32.mrb[0].mxu0
        %v1117 = vpop.f32.mrb[0].mxu0
        %v1118 = vadd.f32 0.0, %v1117
        %v1119 = vpop.f32.mrb[0].mxu0
        %1120 = vmatprep.mubr.bf16.mxu0 %v727
        %1121 = vmatmul.mubr.bf16.gmra.mrb[0].mxu0 %v726
        %v1122 = vpop.f32.mrb[0].mxu0
        %v1123 = vadd.f32 0.0, %v1122
        %v1124 = vpop.f32.mrb[0].mxu0
        %v1125 = vpop.f32.mrb[0].mxu0
        %v1126 = vadd.f32 0.0, %v1125
        %v1127 = vpop.f32.mrb[0].mxu0
        %1128 = vmatprep.mubr.bf16.mxu0 %v729
        %1129 = vmatmul.mubr.bf16.gmra.mrb[0].mxu0 %v728
        %v1130 = vpop.f32.mrb[0].mxu0
        %v1131 = vadd.f32 0.0, %v1130
        %v1132 = vpop.f32.mrb[0].mxu0
        %v1133 = vpop.f32.mrb[0].mxu0
        %v1134 = vadd.f32 0.0, %v1133
        %v1135 = vpop.f32.mrb[0].mxu0
        %1136 = vmatprep.mubr.bf16.mxu0 %v731
        %1137 = vmatmul.mubr.bf16.gmra.mrb[0].mxu0 %v730
        %v1138 = vpop.f32.mrb[0].mxu0
        %v1139 = vadd.f32 0.0, %v1138
        %v1140 = vpop.f32.mrb[0].mxu0
        %v1141 = vpop.f32.mrb[0].mxu0
        %v1142 = vadd.f32 0.0, %v1141
        %v1143 = vpop.f32.mrb[0].mxu0
        %1144 = vmatprep.mubr.bf16.mxu0 %v733
        %1145 = vmatmul.mubr.bf16.gmra.mrb[0].mxu0 %v732
        %v1146 = vpop.f32.mrb[0].mxu0
        %v1147 = vadd.f32 0.0, %v1146
        %v1148 = vpop.f32.mrb[0].mxu0
        %v1149 = vpop.f32.mrb[0].mxu0
        %v1150 = vadd.f32 0.0, %v1149
        %v1151 = vpop.f32.mrb[0].mxu0
        %1152 = vmatprep.mubr.bf16.mxu0 %v735
        %1153 = vmatmul.mubr.bf16.gmra.mrb[0].mxu0 %v734
        %v1154 = vpop.f32.mrb[0].mxu0
        %v1155 = vadd.f32 0.0, %v1154
        %v1156 = vpop.f32.mrb[0].mxu0
        %v1157 = vpop.f32.mrb[0].mxu0
        %v1158 = vadd.f32 0.0, %v1157
        %v1159 = vpop.f32.mrb[0].mxu0
        %1160 = vmatprep.mubr.bf16.mxu0 %v737
        %1161 = vmatmul.mubr.bf16.gmra.mrb[0].mxu0 %v736
        %v1162 = vpop.f32.mrb[0].mxu0
        %v1163 = vadd.f32 0.0, %v1162
        %v1164 = vpop.f32.mrb[0].mxu0
        %v1165 = vpop.f32.mrb[0].mxu0
        %v1166 = vadd.f32 0.0, %v1165
        %v1167 = vpop.f32.mrb[0].mxu0
        %1168 = vmatprep.mubr.bf16.mxu0 %v739
        %1169 = vmatmul.mubr.bf16.gmra.mrb[0].mxu0 %v738
        %v1170 = vpop.f32.mrb[0].mxu0
        %v1171 = vadd.f32 0.0, %v1170
        %v1172 = vpop.f32.mrb[0].mxu0
        %v1173 = vpop.f32.mrb[0].mxu0
        %v1174 = vadd.f32 0.0, %v1173
        %v1175 = vpop.f32.mrb[0].mxu0
        %1176 = vmatprep.mubr.bf16.mxu0 %v741
        %1177 = vmatmul.mubr.bf16.gmra.mrb[0].mxu0 %v740
        %v1178 = vpop.f32.mrb[0].mxu0
        %v1179 = vadd.f32 0.0, %v1178
        %v1180 = vpop.f32.mrb[0].mxu0
        %v1181 = vpop.f32.mrb[0].mxu0
        %v1182 = vadd.f32 0.0, %v1181
        %v1183 = vpop.f32.mrb[0].mxu0
        %1184 = vmatprep.mubr.bf16.mxu0 %v743
        %1185 = vmatmul.mubr.bf16.gmra.mrb[0].mxu0 %v742
        %v1186 = vpop.f32.mrb[0].mxu0
        %v1187 = vadd.f32 0.0, %v1186
        %v1188 = vpop.f32.mrb[0].mxu0
        %v1189 = vpop.f32.mrb[0].mxu0
        %v1190 = vadd.f32 0.0, %v1189
        %v1191 = vpop.f32.mrb[0].mxu0
        %1192 = vdwg.mxu0
        %v1193 = vadd.f32 %v328, %v939
        %v1194 = vadd.f32 %v329, %v942
        %v1195 = vadd.f32 %v330, %v947
        %v1196 = vadd.f32 %v331, %v950
        %v1197 = vadd.f32 %v332, %v955
        %v1198 = vadd.f32 %v333, %v958
        %v1199 = vadd.f32 %v334, %v963
        %v1200 = vadd.f32 %v335, %v966
        %v1201 = vadd.f32 %v336, %v971
        %v1202 = vadd.f32 %v337, %v974
        %v1203 = vadd.f32 %v338, %v979
        %v1204 = vadd.f32 %v339, %v982
        %v1205 = vadd.f32 %v340, %v987
        %v1206 = vadd.f32 %v341, %v990
        %v1207 = vadd.f32 %v342, %v995
        %v1208 = vadd.f32 %v343, %v998
        %v1209 = vadd.f32 %v344, %v1003
        %v1210 = vadd.f32 %v345, %v1006
        %v1211 = vadd.f32 %v346, %v1011
        %v1212 = vadd.f32 %v347, %v1014
        %v1213 = vadd.f32 %v348, %v1019
        %v1214 = vadd.f32 %v349, %v1022
        %v1215 = vadd.f32 %v350, %v1027
        %v1216 = vadd.f32 %v351, %v1030
        %v1217 = vadd.f32 %v352, %v1035
        %v1218 = vadd.f32 %v353, %v1038
        %v1219 = vadd.f32 %v354, %v1043
        %v1220 = vadd.f32 %v355, %v1046
        %v1221 = vadd.f32 %v356, %v1051
        %v1222 = vadd.f32 %v357, %v1054
        %v1223 = vadd.f32 %v358, %v1059
        %v1224 = vadd.f32 %v359, %v1062
        %v1225 = vadd.f32 %v360, %v1067
        %v1226 = vadd.f32 %v361, %v1070
        %v1227 = vadd.f32 %v362, %v1075
        %v1228 = vadd.f32 %v363, %v1078
        %v1229 = vadd.f32 %v364, %v1083
        %v1230 = vadd.f32 %v365, %v1086
        %v1231 = vadd.f32 %v366, %v1091
        %v1232 = vadd.f32 %v367, %v1094
        %v1233 = vadd.f32 %v368, %v1099
        %v1234 = vadd.f32 %v369, %v1102
        %v1235 = vadd.f32 %v370, %v1107
        %v1236 = vadd.f32 %v371, %v1110
        %v1237 = vadd.f32 %v372, %v1115
        %v1238 = vadd.f32 %v373, %v1118
        %v1239 = vadd.f32 %v374, %v1123
        %v1240 = vadd.f32 %v375, %v1126
        %v1241 = vadd.f32 %v376, %v1131
        %v1242 = vadd.f32 %v377, %v1134
        %v1243 = vadd.f32 %v378, %v1139
        %v1244 = vadd.f32 %v379, %v1142
        %v1245 = vadd.f32 %v380, %v1147
        %v1246 = vadd.f32 %v381, %v1150
        %v1247 = vadd.f32 %v382, %v1155
        %v1248 = vadd.f32 %v383, %v1158
        %v1249 = vadd.f32 %v384, %v1163
        %v1250 = vadd.f32 %v385, %v1166
        %v1251 = vadd.f32 %v386, %v1171
        %v1252 = vadd.f32 %v387, %v1174
        %v1253 = vadd.f32 %v388, %v1179
        %v1254 = vadd.f32 %v389, %v1182
        %v1255 = vadd.f32 %v390, %v1187
        %v1256 = vadd.f32 %v391, %v1190
        %1257 = vst [vmem:[#allocation2] sm:$0xff] %v1193
        %1258 = vst [vmem:[#allocation2 + $0x8] sm:$0xff] %v1194
        %1259 = vst [vmem:[#allocation2 + $0x10] sm:$0xff] %v1195
        %1260 = vst [vmem:[#allocation2 + $0x18] sm:$0xff] %v1196
        %1261 = vst [vmem:[#allocation2 + $0x20] sm:$0xff] %v1197
        %1262 = vst [vmem:[#allocation2 + $0x28] sm:$0xff] %v1198
        %1263 = vst [vmem:[#allocation2 + $0x30] sm:$0xff] %v1199
        %1264 = vst [vmem:[#allocation2 + $0x38] sm:$0xff] %v1200
        %1265 = vst [vmem:[#allocation2 + $0x40] sm:$0xff] %v1201
        %1266 = vst [vmem:[#allocation2 + $0x48] sm:$0xff] %v1202
        %1267 = vst [vmem:[#allocation2 + $0x50] sm:$0xff] %v1203
        %1268 = vst [vmem:[#allocation2 + $0x58] sm:$0xff] %v1204
        %1269 = vst [vmem:[#allocation2 + $0x60] sm:$0xff] %v1205
        %1270 = vst [vmem:[#allocation2 + $0x68] sm:$0xff] %v1206
        %1271 = vst [vmem:[#allocation2 + $0x70] sm:$0xff] %v1207
        %1272 = vst [vmem:[#allocation2 + $0x78] sm:$0xff] %v1208
        %1273 = vst [vmem:[#allocation2 + $0x80] sm:$0xff] %v1209
        %1274 = vst [vmem:[#allocation2 + $0x88] sm:$0xff] %v1210
        %1275 = vst [vmem:[#allocation2 + $0x90] sm:$0xff] %v1211
        %1276 = vst [vmem:[#allocation2 + $0x98] sm:$0xff] %v1212
        %1277 = vst [vmem:[#allocation2 + $0xa0] sm:$0xff] %v1213
        %1278 = vst [vmem:[#allocation2 + $0xa8] sm:$0xff] %v1214
        %1279 = vst [vmem:[#allocation2 + $0xb0] sm:$0xff] %v1215
        %1280 = vst [vmem:[#allocation2 + $0xb8] sm:$0xff] %v1216
        %1281 = vst [vmem:[#allocation2 + $0xc0] sm:$0xff] %v1217
        %1282 = vst [vmem:[#allocation2 + $0xc8] sm:$0xff] %v1218
        %1283 = vst [vmem:[#allocation2 + $0xd0] sm:$0xff] %v1219
        %1284 = vst [vmem:[#allocation2 + $0xd8] sm:$0xff] %v1220
        %1285 = vst [vmem:[#allocation2 + $0xe0] sm:$0xff] %v1221
        %1286 = vst [vmem:[#allocation2 + $0xe8] sm:$0xff] %v1222
        %1287 = vst [vmem:[#allocation2 + $0xf0] sm:$0xff] %v1223
        %1288 = vst [vmem:[#allocation2 + $0xf8] sm:$0xff] %v1224
        %1289 = vst [vmem:[#allocation2 + $0x100] sm:$0xff] %v1225
        %1290 = vst [vmem:[#allocation2 + $0x108] sm:$0xff] %v1226
        %1291 = vst [vmem:[#allocation2 + $0x110] sm:$0xff] %v1227
        %1292 = vst [vmem:[#allocation2 + $0x118] sm:$0xff] %v1228
        %1293 = vst [vmem:[#allocation2 + $0x120] sm:$0xff] %v1229
        %1294 = vst [vmem:[#allocation2 + $0x128] sm:$0xff] %v1230
        %1295 = vst [vmem:[#allocation2 + $0x130] sm:$0xff] %v1231
        %1296 = vst [vmem:[#allocation2 + $0x138] sm:$0xff] %v1232
        %1297 = vst [vmem:[#allocation2 + $0x140] sm:$0xff] %v1233
        %1298 = vst [vmem:[#allocation2 + $0x148] sm:$0xff] %v1234
        %1299 = vst [vmem:[#allocation2 + $0x150] sm:$0xff] %v1235
        %1300 = vst [vmem:[#allocation2 + $0x158] sm:$0xff] %v1236
        %1301 = vst [vmem:[#allocation2 + $0x160] sm:$0xff] %v1237
        %1302 = vst [vmem:[#allocation2 + $0x168] sm:$0xff] %v1238
        %1303 = vst [vmem:[#allocation2 + $0x170] sm:$0xff] %v1239
        %1304 = vst [vmem:[#allocation2 + $0x178] sm:$0xff] %v1240
        %1305 = vst [vmem:[#allocation2 + $0x180] sm:$0xff] %v1241
        %1306 = vst [vmem:[#allocation2 + $0x188] sm:$0xff] %v1242
        %1307 = vst [vmem:[#allocation2 + $0x190] sm:$0xff] %v1243
        %1308 = vst [vmem:[#allocation2 + $0x198] sm:$0xff] %v1244
        %1309 = vst [vmem:[#allocation2 + $0x1a0] sm:$0xff] %v1245
        %1310 = vst [vmem:[#allocation2 + $0x1a8] sm:$0xff] %v1246
        %1311 = vst [vmem:[#allocation2 + $0x1b0] sm:$0xff] %v1247
        %1312 = vst [vmem:[#allocation2 + $0x1b8] sm:$0xff] %v1248
        %1313 = vst [vmem:[#allocation2 + $0x1c0] sm:$0xff] %v1249
        %1314 = vst [vmem:[#allocation2 + $0x1c8] sm:$0xff] %v1250
        %1315 = vst [vmem:[#allocation2 + $0x1d0] sm:$0xff] %v1251
        %1316 = vst [vmem:[#allocation2 + $0x1d8] sm:$0xff] %v1252
        %1317 = vst [vmem:[#allocation2 + $0x1e0] sm:$0xff] %v1253
        %1318 = vst [vmem:[#allocation2 + $0x1e8] sm:$0xff] %v1254
        %1319 = vst [vmem:[#allocation2 + $0x1f0] sm:$0xff] %v1255
        %1320 = vst [vmem:[#allocation2 + $0x1f8] sm:$0xff] %v1256
        // Predicated region
        $region45: #{tpu_custom_call.1} parent=31 // pred_check
          %p1321 = pneg %p260
        $region46: #{tpu_custom_call.1} parent=31 // pred_check_branch
          %1323 = sbr.rel (%p1321) target = $region48
        $region47: #{tpu_custom_call.1} parent=31 // pred_region
          %v1324 = vld [vmem:[#allocation2] sm:$0xff]
          %v1325 = vld [vmem:[#allocation2 + $0x8] sm:$0xff]
          %v1326 = vld [vmem:[#allocation2 + $0x10] sm:$0xff]
          %v1327 = vld [vmem:[#allocation2 + $0x18] sm:$0xff]
          %v1328 = vld [vmem:[#allocation2 + $0x20] sm:$0xff]
          %v1329 = vld [vmem:[#allocation2 + $0x28] sm:$0xff]
          %v1330 = vld [vmem:[#allocation2 + $0x30] sm:$0xff]
          %v1331 = vld [vmem:[#allocation2 + $0x38] sm:$0xff]
          %v1332 = vld [vmem:[#allocation2 + $0x40] sm:$0xff]
          %v1333 = vld [vmem:[#allocation2 + $0x48] sm:$0xff]
          %v1334 = vld [vmem:[#allocation2 + $0x50] sm:$0xff]
          %v1335 = vld [vmem:[#allocation2 + $0x58] sm:$0xff]
          %v1336 = vld [vmem:[#allocation2 + $0x60] sm:$0xff]
          %v1337 = vld [vmem:[#allocation2 + $0x68] sm:$0xff]
          %v1338 = vld [vmem:[#allocation2 + $0x70] sm:$0xff]
          %v1339 = vld [vmem:[#allocation2 + $0x78] sm:$0xff]
          %v1340 = vld [vmem:[#allocation2 + $0x80] sm:$0xff]
          %v1341 = vld [vmem:[#allocation2 + $0x88] sm:$0xff]
          %v1342 = vld [vmem:[#allocation2 + $0x90] sm:$0xff]
          %v1343 = vld [vmem:[#allocation2 + $0x98] sm:$0xff]
          %v1344 = vld [vmem:[#allocation2 + $0xa0] sm:$0xff]
          %v1345 = vld [vmem:[#allocation2 + $0xa8] sm:$0xff]
          %v1346 = vld [vmem:[#allocation2 + $0xb0] sm:$0xff]
          %v1347 = vld [vmem:[#allocation2 + $0xb8] sm:$0xff]
          %v1348 = vld [vmem:[#allocation2 + $0xc0] sm:$0xff]
          %v1349 = vld [vmem:[#allocation2 + $0xc8] sm:$0xff]
          %v1350 = vld [vmem:[#allocation2 + $0xd0] sm:$0xff]
          %v1351 = vld [vmem:[#allocation2 + $0xd8] sm:$0xff]
          %v1352 = vld [vmem:[#allocation2 + $0xe0] sm:$0xff]
          %v1353 = vld [vmem:[#allocation2 + $0xe8] sm:$0xff]
          %v1354 = vld [vmem:[#allocation2 + $0xf0] sm:$0xff]
          %v1355 = vld [vmem:[#allocation2 + $0xf8] sm:$0xff]
          %v1356 = vld [vmem:[#allocation2 + $0x100] sm:$0xff]
          %v1357 = vld [vmem:[#allocation2 + $0x108] sm:$0xff]
          %v1358 = vld [vmem:[#allocation2 + $0x110] sm:$0xff]
          %v1359 = vld [vmem:[#allocation2 + $0x118] sm:$0xff]
          %v1360 = vld [vmem:[#allocation2 + $0x120] sm:$0xff]
          %v1361 = vld [vmem:[#allocation2 + $0x128] sm:$0xff]
          %v1362 = vld [vmem:[#allocation2 + $0x130] sm:$0xff]
          %v1363 = vld [vmem:[#allocation2 + $0x138] sm:$0xff]
          %v1364 = vld [vmem:[#allocation2 + $0x140] sm:$0xff]
          %v1365 = vld [vmem:[#allocation2 + $0x148] sm:$0xff]
          %v1366 = vld [vmem:[#allocation2 + $0x150] sm:$0xff]
          %v1367 = vld [vmem:[#allocation2 + $0x158] sm:$0xff]
          %v1368 = vld [vmem:[#allocation2 + $0x160] sm:$0xff]
          %v1369 = vld [vmem:[#allocation2 + $0x168] sm:$0xff]
          %v1370 = vld [vmem:[#allocation2 + $0x170] sm:$0xff]
          %v1371 = vld [vmem:[#allocation2 + $0x178] sm:$0xff]
          %v1372 = vld [vmem:[#allocation2 + $0x180] sm:$0xff]
          %v1373 = vld [vmem:[#allocation2 + $0x188] sm:$0xff]
          %v1374 = vld [vmem:[#allocation2 + $0x190] sm:$0xff]
          %v1375 = vld [vmem:[#allocation2 + $0x198] sm:$0xff]
          %v1376 = vld [vmem:[#allocation2 + $0x1a0] sm:$0xff]
          %v1377 = vld [vmem:[#allocation2 + $0x1a8] sm:$0xff]
          %v1378 = vld [vmem:[#allocation2 + $0x1b0] sm:$0xff]
          %v1379 = vld [vmem:[#allocation2 + $0x1b8] sm:$0xff]
          %v1380 = vld [vmem:[#allocation2 + $0x1c0] sm:$0xff]
          %v1381 = vld [vmem:[#allocation2 + $0x1c8] sm:$0xff]
          %v1382 = vld [vmem:[#allocation2 + $0x1d0] sm:$0xff]
          %v1383 = vld [vmem:[#allocation2 + $0x1d8] sm:$0xff]
          %v1384 = vld [vmem:[#allocation2 + $0x1e0] sm:$0xff]
          %v1385 = vld [vmem:[#allocation2 + $0x1e8] sm:$0xff]
          %v1386 = vld [vmem:[#allocation2 + $0x1f0] sm:$0xff]
          %v1387 = vld [vmem:[#allocation2 + $0x1f8] sm:$0xff]
          %v1388 = vld [vmem:[%s257] sm:$0x1]
          %v1390 = vlaneseq
          %v1391 = vshrl.u32 %v1390, 7
          %v1392 = vsub.s32 0, %v1391
          %v1393 = vrot.slane %v1388, %v1392
          %v1395 = vadd.f32 %v1324, %v1393
          %v1396 = vadd.f32 %v1325, %v1393
          %v1397 = vadd.f32 %v1326, %v1393
          %v1398 = vadd.f32 %v1327, %v1393
          %v1399 = vadd.f32 %v1328, %v1393
          %v1400 = vadd.f32 %v1329, %v1393
          %v1401 = vadd.f32 %v1330, %v1393
          %v1402 = vadd.f32 %v1331, %v1393
          %v1403 = vadd.f32 %v1332, %v1393
          %v1404 = vadd.f32 %v1333, %v1393
          %v1405 = vadd.f32 %v1334, %v1393
          %v1406 = vadd.f32 %v1335, %v1393
          %v1407 = vadd.f32 %v1336, %v1393
          %v1408 = vadd.f32 %v1337, %v1393
          %v1409 = vadd.f32 %v1338, %v1393
          %v1410 = vadd.f32 %v1339, %v1393
          %v1411 = vadd.f32 %v1340, %v1393
          %v1412 = vadd.f32 %v1341, %v1393
          %v1413 = vadd.f32 %v1342, %v1393
          %v1414 = vadd.f32 %v1343, %v1393
          %v1415 = vadd.f32 %v1344, %v1393
          %v1416 = vadd.f32 %v1345, %v1393
          %v1417 = vadd.f32 %v1346, %v1393
          %v1418 = vadd.f32 %v1347, %v1393
          %v1419 = vadd.f32 %v1348, %v1393
          %v1420 = vadd.f32 %v1349, %v1393
          %v1421 = vadd.f32 %v1350, %v1393
          %v1422 = vadd.f32 %v1351, %v1393
          %v1423 = vadd.f32 %v1352, %v1393
          %v1424 = vadd.f32 %v1353, %v1393
          %v1425 = vadd.f32 %v1354, %v1393
          %v1426 = vadd.f32 %v1355, %v1393
          %v1427 = vadd.f32 %v1356, %v1393
          %v1428 = vadd.f32 %v1357, %v1393
          %v1429 = vadd.f32 %v1358, %v1393
          %v1430 = vadd.f32 %v1359, %v1393
          %v1431 = vadd.f32 %v1360, %v1393
          %v1432 = vadd.f32 %v1361, %v1393
          %v1433 = vadd.f32 %v1362, %v1393
          %v1434 = vadd.f32 %v1363, %v1393
          %v1435 = vadd.f32 %v1364, %v1393
          %v1436 = vadd.f32 %v1365, %v1393
          %v1437 = vadd.f32 %v1366, %v1393
          %v1438 = vadd.f32 %v1367, %v1393
          %v1439 = vadd.f32 %v1368, %v1393
          %v1440 = vadd.f32 %v1369, %v1393
          %v1441 = vadd.f32 %v1370, %v1393
          %v1442 = vadd.f32 %v1371, %v1393
          %v1443 = vadd.f32 %v1372, %v1393
          %v1444 = vadd.f32 %v1373, %v1393
          %v1445 = vadd.f32 %v1374, %v1393
          %v1446 = vadd.f32 %v1375, %v1393
          %v1447 = vadd.f32 %v1376, %v1393
          %v1448 = vadd.f32 %v1377, %v1393
          %v1449 = vadd.f32 %v1378, %v1393
          %v1450 = vadd.f32 %v1379, %v1393
          %v1451 = vadd.f32 %v1380, %v1393
          %v1452 = vadd.f32 %v1381, %v1393
          %v1453 = vadd.f32 %v1382, %v1393
          %v1454 = vadd.f32 %v1383, %v1393
          %v1455 = vadd.f32 %v1384, %v1393
          %v1456 = vadd.f32 %v1385, %v1393
          %v1457 = vadd.f32 %v1386, %v1393
          %v1458 = vadd.f32 %v1387, %v1393
          %v1459 = vmax.f32 %v1395, 0.0
          %v1460 = vmax.f32 %v1396, 0.0
          %v1461 = vmax.f32 %v1397, 0.0
          %v1462 = vmax.f32 %v1398, 0.0
          %v1463 = vmax.f32 %v1399, 0.0
          %v1464 = vmax.f32 %v1400, 0.0
          %v1465 = vmax.f32 %v1401, 0.0
          %v1466 = vmax.f32 %v1402, 0.0
          %v1467 = vmax.f32 %v1403, 0.0
          %v1468 = vmax.f32 %v1404, 0.0
          %v1469 = vmax.f32 %v1405, 0.0
          %v1470 = vmax.f32 %v1406, 0.0
          %v1471 = vmax.f32 %v1407, 0.0
          %v1472 = vmax.f32 %v1408, 0.0
          %v1473 = vmax.f32 %v1409, 0.0
          %v1474 = vmax.f32 %v1410, 0.0
          %v1475 = vmax.f32 %v1411, 0.0
          %v1476 = vmax.f32 %v1412, 0.0
          %v1477 = vmax.f32 %v1413, 0.0
          %v1478 = vmax.f32 %v1414, 0.0
          %v1479 = vmax.f32 %v1415, 0.0
          %v1480 = vmax.f32 %v1416, 0.0
          %v1481 = vmax.f32 %v1417, 0.0
          %v1482 = vmax.f32 %v1418, 0.0
          %v1483 = vmax.f32 %v1419, 0.0
          %v1484 = vmax.f32 %v1420, 0.0
          %v1485 = vmax.f32 %v1421, 0.0
          %v1486 = vmax.f32 %v1422, 0.0
          %v1487 = vmax.f32 %v1423, 0.0
          %v1488 = vmax.f32 %v1424, 0.0
          %v1489 = vmax.f32 %v1425, 0.0
          %v1490 = vmax.f32 %v1426, 0.0
          %v1491 = vmax.f32 %v1427, 0.0
          %v1492 = vmax.f32 %v1428, 0.0
          %v1493 = vmax.f32 %v1429, 0.0
          %v1494 = vmax.f32 %v1430, 0.0
          %v1495 = vmax.f32 %v1431, 0.0
          %v1496 = vmax.f32 %v1432, 0.0
          %v1497 = vmax.f32 %v1433, 0.0
          %v1498 = vmax.f32 %v1434, 0.0
          %v1499 = vmax.f32 %v1435, 0.0
          %v1500 = vmax.f32 %v1436, 0.0
          %v1501 = vmax.f32 %v1437, 0.0
          %v1502 = vmax.f32 %v1438, 0.0
          %v1503 = vmax.f32 %v1439, 0.0
          %v1504 = vmax.f32 %v1440, 0.0
          %v1505 = vmax.f32 %v1441, 0.0
          %v1506 = vmax.f32 %v1442, 0.0
          %v1507 = vmax.f32 %v1443, 0.0
          %v1508 = vmax.f32 %v1444, 0.0
          %v1509 = vmax.f32 %v1445, 0.0
          %v1510 = vmax.f32 %v1446, 0.0
          %v1511 = vmax.f32 %v1447, 0.0
          %v1512 = vmax.f32 %v1448, 0.0
          %v1513 = vmax.f32 %v1449, 0.0
          %v1514 = vmax.f32 %v1450, 0.0
          %v1515 = vmax.f32 %v1451, 0.0
          %v1516 = vmax.f32 %v1452, 0.0
          %v1517 = vmax.f32 %v1453, 0.0
          %v1518 = vmax.f32 %v1454, 0.0
          %v1519 = vmax.f32 %v1455, 0.0
          %v1520 = vmax.f32 %v1456, 0.0
          %v1521 = vmax.f32 %v1457, 0.0
          %v1522 = vmax.f32 %v1458, 0.0
          %v1523 = vpack.c.bf16 %v1460, %v1459
          %v1524 = vpack.c.bf16 %v1462, %v1461
          %v1525 = vpack.c.bf16 %v1464, %v1463
          %v1526 = vpack.c.bf16 %v1466, %v1465
          %v1527 = vpack.c.bf16 %v1468, %v1467
          %v1528 = vpack.c.bf16 %v1470, %v1469
          %v1529 = vpack.c.bf16 %v1472, %v1471
          %v1530 = vpack.c.bf16 %v1474, %v1473
          %v1531 = vpack.c.bf16 %v1476, %v1475
          %v1532 = vpack.c.bf16 %v1478, %v1477
          %v1533 = vpack.c.bf16 %v1480, %v1479
          %v1534 = vpack.c.bf16 %v1482, %v1481
          %v1535 = vpack.c.bf16 %v1484, %v1483
          %v1536 = vpack.c.bf16 %v1486, %v1485
          %v1537 = vpack.c.bf16 %v1488, %v1487
          %v1538 = vpack.c.bf16 %v1490, %v1489
          %v1539 = vpack.c.bf16 %v1492, %v1491
          %v1540 = vpack.c.bf16 %v1494, %v1493
          %v1541 = vpack.c.bf16 %v1496, %v1495
          %v1542 = vpack.c.bf16 %v1498, %v1497
          %v1543 = vpack.c.bf16 %v1500, %v1499
          %v1544 = vpack.c.bf16 %v1502, %v1501
          %v1545 = vpack.c.bf16 %v1504, %v1503
          %v1546 = vpack.c.bf16 %v1506, %v1505
          %v1547 = vpack.c.bf16 %v1508, %v1507
          %v1548 = vpack.c.bf16 %v1510, %v1509
          %v1549 = vpack.c.bf16 %v1512, %v1511
          %v1550 = vpack.c.bf16 %v1514, %v1513
          %v1551 = vpack.c.bf16 %v1516, %v1515
          %v1552 = vpack.c.bf16 %v1518, %v1517
          %v1553 = vpack.c.bf16 %v1520, %v1519
          %v1554 = vpack.c.bf16 %v1522, %v1521
          %v1587 = vunpack.c.l.b16 %v1523
          %v1588 = vunpack.c.h.b16 %v1523
          %v1589 = vunpack.c.l.b16 %v1524
          %v1590 = vunpack.c.h.b16 %v1524
          %v1591 = vunpack.c.l.b16 %v1525
          %v1592 = vunpack.c.h.b16 %v1525
          %v1593 = vunpack.c.l.b16 %v1526
          %v1594 = vunpack.c.h.b16 %v1526
          %v1595 = vunpack.c.l.b16 %v1527
          %v1596 = vunpack.c.h.b16 %v1527
          %v1597 = vunpack.c.l.b16 %v1528
          %v1598 = vunpack.c.h.b16 %v1528
          %v1599 = vunpack.c.l.b16 %v1529
          %v1600 = vunpack.c.h.b16 %v1529
          %v1601 = vunpack.c.l.b16 %v1530
          %v1602 = vunpack.c.h.b16 %v1530
          %v1603 = vunpack.c.l.b16 %v1531
          %v1604 = vunpack.c.h.b16 %v1531
          %v1605 = vunpack.c.l.b16 %v1532
          %v1606 = vunpack.c.h.b16 %v1532
          %v1607 = vunpack.c.l.b16 %v1533
          %v1608 = vunpack.c.h.b16 %v1533
          %v1609 = vunpack.c.l.b16 %v1534
          %v1610 = vunpack.c.h.b16 %v1534
          %v1611 = vunpack.c.l.b16 %v1535
          %v1612 = vunpack.c.h.b16 %v1535
          %v1613 = vunpack.c.l.b16 %v1536
          %v1614 = vunpack.c.h.b16 %v1536
          %v1615 = vunpack.c.l.b16 %v1537
          %v1616 = vunpack.c.h.b16 %v1537
          %v1617 = vunpack.c.l.b16 %v1538
          %v1618 = vunpack.c.h.b16 %v1538
          %v1619 = vunpack.c.l.b16 %v1539
          %v1620 = vunpack.c.h.b16 %v1539
          %v1621 = vunpack.c.l.b16 %v1540
          %v1622 = vunpack.c.h.b16 %v1540
          %v1623 = vunpack.c.l.b16 %v1541
          %v1624 = vunpack.c.h.b16 %v1541
          %v1625 = vunpack.c.l.b16 %v1542
          %v1626 = vunpack.c.h.b16 %v1542
          %v1627 = vunpack.c.l.b16 %v1543
          %v1628 = vunpack.c.h.b16 %v1543
          %v1629 = vunpack.c.l.b16 %v1544
          %v1630 = vunpack.c.h.b16 %v1544
          %v1631 = vunpack.c.l.b16 %v1545
          %v1632 = vunpack.c.h.b16 %v1545
          %v1633 = vunpack.c.l.b16 %v1546
          %v1634 = vunpack.c.h.b16 %v1546
          %v1635 = vunpack.c.l.b16 %v1547
          %v1636 = vunpack.c.h.b16 %v1547
          %v1637 = vunpack.c.l.b16 %v1548
          %v1638 = vunpack.c.h.b16 %v1548
          %v1639 = vunpack.c.l.b16 %v1549
          %v1640 = vunpack.c.h.b16 %v1549
          %v1641 = vunpack.c.l.b16 %v1550
          %v1642 = vunpack.c.h.b16 %v1550
          %v1643 = vunpack.c.l.b16 %v1551
          %v1644 = vunpack.c.h.b16 %v1551
          %v1645 = vunpack.c.l.b16 %v1552
          %v1646 = vunpack.c.h.b16 %v1552
          %v1647 = vunpack.c.l.b16 %v1553
          %v1648 = vunpack.c.h.b16 %v1553
          %v1649 = vunpack.c.l.b16 %v1554
          %v1650 = vunpack.c.h.b16 %v1554
          %v1651 = vpack.c.b16 %v1587, %v1587
          %v1652 = vpack.c.b16 %v1588, %v1588
          %v1653 = vpack.c.b16 %v1589, %v1589
          %v1654 = vpack.c.b16 %v1590, %v1590
          %v1655 = vpack.c.b16 %v1591, %v1591
          %v1656 = vpack.c.b16 %v1592, %v1592
          %v1657 = vpack.c.b16 %v1593, %v1593
          %v1658 = vpack.c.b16 %v1594, %v1594
          %v1659 = vpack.c.b16 %v1595, %v1595
          %v1660 = vpack.c.b16 %v1596, %v1596
          %v1661 = vpack.c.b16 %v1597, %v1597
          %v1662 = vpack.c.b16 %v1598, %v1598
          %v1663 = vpack.c.b16 %v1599, %v1599
          %v1664 = vpack.c.b16 %v1600, %v1600
          %v1665 = vpack.c.b16 %v1601, %v1601
          %v1666 = vpack.c.b16 %v1602, %v1602
          %v1667 = vpack.c.b16 %v1603, %v1603
          %v1668 = vpack.c.b16 %v1604, %v1604
          %v1669 = vpack.c.b16 %v1605, %v1605
          %v1670 = vpack.c.b16 %v1606, %v1606
          %v1671 = vpack.c.b16 %v1607, %v1607
          %v1672 = vpack.c.b16 %v1608, %v1608
          %v1673 = vpack.c.b16 %v1609, %v1609
          %v1674 = vpack.c.b16 %v1610, %v1610
          %v1675 = vpack.c.b16 %v1611, %v1611
          %v1676 = vpack.c.b16 %v1612, %v1612
          %v1677 = vpack.c.b16 %v1613, %v1613
          %v1678 = vpack.c.b16 %v1614, %v1614
          %v1679 = vpack.c.b16 %v1615, %v1615
          %v1680 = vpack.c.b16 %v1616, %v1616
          %v1681 = vpack.c.b16 %v1617, %v1617
          %v1682 = vpack.c.b16 %v1618, %v1618
          %v1683 = vpack.c.b16 %v1619, %v1619
          %v1684 = vpack.c.b16 %v1620, %v1620
          %v1685 = vpack.c.b16 %v1621, %v1621
          %v1686 = vpack.c.b16 %v1622, %v1622
          %v1687 = vpack.c.b16 %v1623, %v1623
          %v1688 = vpack.c.b16 %v1624, %v1624
          %v1689 = vpack.c.b16 %v1625, %v1625
          %v1690 = vpack.c.b16 %v1626, %v1626
          %v1691 = vpack.c.b16 %v1627, %v1627
          %v1692 = vpack.c.b16 %v1628, %v1628
          %v1693 = vpack.c.b16 %v1629, %v1629
          %v1694 = vpack.c.b16 %v1630, %v1630
          %v1695 = vpack.c.b16 %v1631, %v1631
          %v1696 = vpack.c.b16 %v1632, %v1632
          %v1697 = vpack.c.b16 %v1633, %v1633
          %v1698 = vpack.c.b16 %v1634, %v1634
          %v1699 = vpack.c.b16 %v1635, %v1635
          %v1700 = vpack.c.b16 %v1636, %v1636
          %v1701 = vpack.c.b16 %v1637, %v1637
          %v1702 = vpack.c.b16 %v1638, %v1638
          %v1703 = vpack.c.b16 %v1639, %v1639
          %v1704 = vpack.c.b16 %v1640, %v1640
          %v1705 = vpack.c.b16 %v1641, %v1641
          %v1706 = vpack.c.b16 %v1642, %v1642
          %v1707 = vpack.c.b16 %v1643, %v1643
          %v1708 = vpack.c.b16 %v1644, %v1644
          %v1709 = vpack.c.b16 %v1645, %v1645
          %v1710 = vpack.c.b16 %v1646, %v1646
          %v1711 = vpack.c.b16 %v1647, %v1647
          %v1712 = vpack.c.b16 %v1648, %v1648
          %v1713 = vpack.c.b16 %v1649, %v1649
          %v1714 = vpack.c.b16 %v1650, %v1650
          %1779 = vst [vmem:[%s251] sm:$0xf] %v1651
          %1780 = vst [vmem:[%s251 + $0x4] sm:$0xf] %v1652
          %1781 = vst [vmem:[%s251 + $0x8] sm:$0xf] %v1653
          %1782 = vst [vmem:[%s251 + $0xc] sm:$0xf] %v1654
          %1783 = vst [vmem:[%s251 + $0x10] sm:$0xf] %v1655
          %1784 = vst [vmem:[%s251 + $0x14] sm:$0xf] %v1656
          %1785 = vst [vmem:[%s251 + $0x18] sm:$0xf] %v1657
          %1786 = vst [vmem:[%s251 + $0x1c] sm:$0xf] %v1658
          %1787 = vst [vmem:[%s251 + $0x20] sm:$0xf] %v1659
          %1788 = vst [vmem:[%s251 + $0x24] sm:$0xf] %v1660
          %1789 = vst [vmem:[%s251 + $0x28] sm:$0xf] %v1661
          %1790 = vst [vmem:[%s251 + $0x2c] sm:$0xf] %v1662
          %1791 = vst [vmem:[%s251 + $0x30] sm:$0xf] %v1663
          %1792 = vst [vmem:[%s251 + $0x34] sm:$0xf] %v1664
          %1793 = vst [vmem:[%s251 + $0x38] sm:$0xf] %v1665
          %1794 = vst [vmem:[%s251 + $0x3c] sm:$0xf] %v1666
          %1795 = vst [vmem:[%s251 + $0x40] sm:$0xf] %v1667
          %1796 = vst [vmem:[%s251 + $0x44] sm:$0xf] %v1668
          %1797 = vst [vmem:[%s251 + $0x48] sm:$0xf] %v1669
          %1798 = vst [vmem:[%s251 + $0x4c] sm:$0xf] %v1670
          %1799 = vst [vmem:[%s251 + $0x50] sm:$0xf] %v1671
          %1800 = vst [vmem:[%s251 + $0x54] sm:$0xf] %v1672
          %1801 = vst [vmem:[%s251 + $0x58] sm:$0xf] %v1673
          %1802 = vst [vmem:[%s251 + $0x5c] sm:$0xf] %v1674
          %1803 = vst [vmem:[%s251 + $0x60] sm:$0xf] %v1675
          %1804 = vst [vmem:[%s251 + $0x64] sm:$0xf] %v1676
          %1805 = vst [vmem:[%s251 + $0x68] sm:$0xf] %v1677
          %1806 = vst [vmem:[%s251 + $0x6c] sm:$0xf] %v1678
          %1807 = vst [vmem:[%s251 + $0x70] sm:$0xf] %v1679
          %1808 = vst [vmem:[%s251 + $0x74] sm:$0xf] %v1680
          %1809 = vst [vmem:[%s251 + $0x78] sm:$0xf] %v1681
          %1810 = vst [vmem:[%s251 + $0x7c] sm:$0xf] %v1682
          %1811 = vst [vmem:[%s251 + $0x80] sm:$0xf] %v1683
          %1812 = vst [vmem:[%s251 + $0x84] sm:$0xf] %v1684
          %1813 = vst [vmem:[%s251 + $0x88] sm:$0xf] %v1685
          %1814 = vst [vmem:[%s251 + $0x8c] sm:$0xf] %v1686
          %1815 = vst [vmem:[%s251 + $0x90] sm:$0xf] %v1687
          %1816 = vst [vmem:[%s251 + $0x94] sm:$0xf] %v1688
          %1817 = vst [vmem:[%s251 + $0x98] sm:$0xf] %v1689
          %1818 = vst [vmem:[%s251 + $0x9c] sm:$0xf] %v1690
          %1819 = vst [vmem:[%s251 + $0xa0] sm:$0xf] %v1691
          %1820 = vst [vmem:[%s251 + $0xa4] sm:$0xf] %v1692
          %1821 = vst [vmem:[%s251 + $0xa8] sm:$0xf] %v1693
          %1822 = vst [vmem:[%s251 + $0xac] sm:$0xf] %v1694
          %1823 = vst [vmem:[%s251 + $0xb0] sm:$0xf] %v1695
          %1824 = vst [vmem:[%s251 + $0xb4] sm:$0xf] %v1696
          %1825 = vst [vmem:[%s251 + $0xb8] sm:$0xf] %v1697
          %1826 = vst [vmem:[%s251 + $0xbc] sm:$0xf] %v1698
          %1827 = vst [vmem:[%s251 + $0xc0] sm:$0xf] %v1699
          %1828 = vst [vmem:[%s251 + $0xc4] sm:$0xf] %v1700
          %1829 = vst [vmem:[%s251 + $0xc8] sm:$0xf] %v1701
          %1830 = vst [vmem:[%s251 + $0xcc] sm:$0xf] %v1702
          %1831 = vst [vmem:[%s251 + $0xd0] sm:$0xf] %v1703
          %1832 = vst [vmem:[%s251 + $0xd4] sm:$0xf] %v1704
          %1833 = vst [vmem:[%s251 + $0xd8] sm:$0xf] %v1705
          %1834 = vst [vmem:[%s251 + $0xdc] sm:$0xf] %v1706
          %1835 = vst [vmem:[%s251 + $0xe0] sm:$0xf] %v1707
          %1836 = vst [vmem:[%s251 + $0xe4] sm:$0xf] %v1708
          %1837 = vst [vmem:[%s251 + $0xe8] sm:$0xf] %v1709
          %1838 = vst [vmem:[%s251 + $0xec] sm:$0xf] %v1710
          %1839 = vst [vmem:[%s251 + $0xf0] sm:$0xf] %v1711
          %1840 = vst [vmem:[%s251 + $0xf4] sm:$0xf] %v1712
          %1841 = vst [vmem:[%s251 + $0xf8] sm:$0xf] %v1713
          %1842 = vst [vmem:[%s251 + $0xfc] sm:$0xf] %v1714
        $region48: #{tpu_custom_call.1} parent=31 // pred_fallthru
          _
        %s1843 = sand.u32 %s132, 1
        %s1844 = scalar_lea.sflag [#allocation5], %s1843
        %s1845 = sand.u32 %s132, 1
        %s1846 = smul.addr %s1845, 256
        %s1847 = scalar_lea.vmem [#allocation8], %s1846
        // Predicated region
        $region49: #{tpu_custom_call.1} parent=31 // pred_check
          %p1848 = pneg %p142
        $region50: #{tpu_custom_call.1} parent=31 // pred_check_branch
          %1850 = sbr.rel (%p1848) target = $region52
        $region51: #{tpu_custom_call.1} parent=31 // pred_region
          %s1851 = smul.u32 64, %s26
          %s1853 = ssub.s32 4096, 4096
          %1854 = vsyncadd %s1844, %s1853
          %s1855 = sadd.s32 %s27, %s1851
          %s1856 = smul.addr %s1855, 64
          %s1857 = scalar_lea.hbm %s3, %s1856
          %s1858 = sshll.u32 %s1847, 4
          %s1859 = int_to_ptr.vmem [resolvable:$true] %s1858
          %1864 = dma.vmem_to_hbm [thread:$0]  %s1859, 4096, %s1857, %s1844, 64, 64, 4
        $region52: #{tpu_custom_call.1} parent=31 // pred_fallthru
          _
      $region32: #{tpu_custom_call.1} parent=5 // pred_fallthru
        _
      %p1865 = scmp.le.s32.totalorder 2, %s16
      // Predicated region
      $region53: #{tpu_custom_call.1} parent=5 // pred_check
        %p1866 = pneg %p1865
      $region54: #{tpu_custom_call.1} parent=5 // pred_check_branch
        %1868 = sbr.rel (%p1866) target = $region56
      $region55: #{tpu_custom_call.1} parent=5 // pred_region
        %s1869 = ssub.s32 %s16, 2
        // Predicated region
        $region57: #{tpu_custom_call.1} parent=55 // pred_check
          %p1870 = pneg %p148
        $region58: #{tpu_custom_call.1} parent=55 // pred_check_branch
          %1872 = sbr.rel (%p1870) target = $region60
        $region59: #{tpu_custom_call.1} parent=55 // pred_region
          %s1873 = sand.u32 %s133, 1
          %s1874 = scalar_lea.sflag [#allocation5], %s1873
          %s1875 = sand.u32 %s133, 1
          %s1876 = smul.addr %s1875, 256
          %s1877 = scalar_lea.vmem [#allocation8], %s1876
          %1878 = dma.done %s1874, 4096
        $region60: #{tpu_custom_call.1} parent=55 // pred_fallthru
          _
      $region56: #{tpu_custom_call.1} parent=5 // pred_fallthru
        _
    $region6: #{tpu_custom_call.1} parent=1 // loop_footer
      %s20 = sadd.s32 1, %s16
    $region7: #{tpu_custom_call.1} parent=1 // loop_footer_branch
      %15 = sbr.rel target = $region3
    $region8: #{tpu_custom_call.1} parent=1 // loop_exit
      _
    %1879 = vsyncpa [#allocation4], 1
    %s1880 = scalar_lea.sflag [#allocation4], 1
    %1881 = vsyncpa %s1880, 1
    %1882 = vsyncpa [#allocation7], 1
    %1883 = vsyncpa [#allocation5], 1
    %s1884 = scalar_lea.sflag [#allocation5], 1
    %1885 = vsyncpa %s1884, 1

</llo_original>
